<compile_context>
chip_gen: v7x
topology: tpu7x:2x2x1
jax: 0.10.0
libtpu: 0.0.40
codegen_flags: <defaults>
</compile_context>

<pallas_src>
import functools
import math

import jax
import jax.numpy as jnp
from jax import lax
from jax.experimental import pallas as pl
from jax.experimental.pallas import tpu as pltpu

BN_EPS = 1e-5
BN_SCALE = 1.0 / math.sqrt(1.0 + BN_EPS)   # gamma=1, beta=0, mean=0, var=1 at init
ACT_DTYPE = jnp.bfloat16                   # activation storage dtype between layers
MXU_DTYPE = jnp.bfloat16                   # MXU operand dtype
VMEM_LIMIT = 32 * 1024 * 1024              # sized against v7x's 64 MiB physical VMEM


def _relu6(x):
    return jnp.minimum(jnp.maximum(x, 0.0), 6.0)


# ----------------------------------------------------------------------------
# Generic fused matmul (bias + activation epilogue), single/2-step grid
# ----------------------------------------------------------------------------
def _pick_tm(m):
    # Review: no forced >=2-step split on 1-TC chips.  Only very large M (the stem,
    # M=2048) is split so the second v7x TensorCore is not idle on the biggest matmul.
    if m <= 512:
        return m
    for cand in (1024, 512, 256, 128, 64, 32, 16, 8):
        if m % cand == 0:
            return cand
    return m


def _matmul_kernel(x_ref, w_ref, b_ref, o_ref, *, act):
    y = jnp.dot(x_ref[...], w_ref[...], preferred_element_type=jnp.float32)
    y = y + b_ref[...]
    if act == "relu6":
        y = _relu6(y)
    elif act == "relu":
        y = jnp.maximum(y, 0.0)
    o_ref[...] = y.astype(o_ref.dtype)


def pallas_matmul_fused(x, w, bias, act, out_dtype):
    m, k = x.shape
    n = w.shape[1]
    tm = _pick_tm(m)
    return pl.pallas_call(
        functools.partial(_matmul_kernel, act=act),
        out_shape=jax.ShapeDtypeStruct((m, n), out_dtype),
        grid=(m // tm,),
        in_specs=[pl.BlockSpec((tm, k), lambda i: (i, 0)),
                  pl.BlockSpec((k, n), lambda i: (0, 0)),
                  pl.BlockSpec((1, n), lambda i: (0, 0))],
        out_specs=pl.BlockSpec((tm, n), lambda i: (i, 0)),
        compiler_params=pltpu.CompilerParams(
            dimension_semantics=("parallel",),
            vmem_limit_bytes=VMEM_LIMIT),
    )(x.astype(MXU_DTYPE), w, bias.reshape(1, n))


# ----------------------------------------------------------------------------
# Fused InvertedResidual block kernel: expand -> dw3x3 -> project (+skip), all in VMEM
# ----------------------------------------------------------------------------
def _make_block_kernel(N, H, W, hidden, stride, has_expand, identity):
    Ho, Wo = H // stride, W // stride

    def kernel(*refs):
        refs = list(refs)
        x_ref = refs.pop(0)
        if has_expand:
            we_ref = refs.pop(0)
            be_ref = refs.pop(0)
        wd_ref = refs.pop(0)
        bd_ref = refs.pop(0)
        wp_ref = refs.pop(0)
        bp_ref = refs.pop(0)
        o_ref, e_scr, exp_scr, dw_scr = refs

        # ---- 1x1 expand (BN folded) + ReLU6; result stays in VMEM ----
        if has_expand:
            e = jnp.dot(x_ref[...], we_ref[...], preferred_element_type=jnp.float32)
            e = _relu6(e + be_ref[...])
        else:
            e = x_ref[...].astype(jnp.float32)
        e_scr[...] = e

        # ---- scatter rows into the zero-padded (phase-split for stride 2) scratch ----
        exp_scr[...] = jnp.zeros(exp_scr.shape, exp_scr.dtype)
        if stride == 1:
            for n in range(N):
                for h in range(H):
                    r = (n * H + h) * W
                    exp_scr[n, h + 1, 1:1 + W, :] = e_scr[r:r + W, :]
            taps = [exp_scr[:, di:di + Ho, dj:dj + Wo, :]
                    for di in range(3) for dj in range(3)]
        else:
            # rows of x were pre-reordered to [odd-w | even-w]; scratch row layout is
            # [zero, odd-w block (Wo), even-w block (Wo)]; H split into parity planes.
            for n in range(N):
                for h in range(H):
                    r = (n * H + h) * W
                    exp_scr[(h + 1) % 2, n, (h + 1) // 2, 1:1 + W, :] = e_scr[r:r + W, :]
            col = {0: (0, Wo), 1: (Wo + 1, 2 * Wo + 1), 2: (1, Wo + 1)}
            taps = [exp_scr[di % 2, :, di // 2:di // 2 + Ho, col[dj][0]:col[dj][1], :]
                    for di in range(3) for dj in range(3)]

        # ---- depthwise 3x3 (BN folded) + ReLU6: pairwise-tree accumulate (f32) ----
        prods = [taps[t] * wd_ref[t] for t in range(9)]
        while len(prods) > 1:
            nxt = [prods[i] + prods[i + 1] for i in range(0, len(prods) - 1, 2)]
            if len(prods) % 2:
                nxt.append(prods[-1])
            prods = nxt
        dw = _relu6(prods[0] + bd_ref[...]).astype(dw_scr.dtype)   # (N, Ho, Wo, hidden)

        for n in range(N):
            for ho in range(Ho):
                r = (n * Ho + ho) * Wo
                dw_scr[r:r + Wo, :] = dw[n, ho]

        # ---- 1x1 project (BN folded, no act) + fused residual ----
        y = jnp.dot(dw_scr[...], wp_ref[...], preferred_element_type=jnp.float32)
        y = y + bp_ref[...]
        if identity:
            y = y + x_ref[...].astype(jnp.float32)
        o_ref[...] = y.astype(o_ref.dtype)

    return kernel


def run_block_fused(x, blk):
    N, H, W, Cin = x.shape
    dwp = blk["dw"]
    stride = dwp["stride"]
    hidden = dwp["w"].shape[-1]
    proj = blk["project"]
    Cout = proj["cout"]
    has_expand = blk["expand"] is not None
    identity = blk["identity"]
    Ho, Wo = H // stride, W // stride

    if stride == 2:
        # w-phase reorder ([odd-w | even-w]) so the in-kernel stride-2 tap gather only
        # needs contiguous slices.  Applied to the narrow (pre-expand) input: cheap.
        xr = jnp.concatenate([x[:, :, 1::2, :], x[:, :, 0::2, :]], axis=2)
    else:
        xr = x
    x2d = xr.reshape(N * H * W, Cin).astype(MXU_DTYPE)

    args = [x2d]
    if has_expand:
        args += [blk["expand"]["w"], blk["expand"]["bias"].reshape(1, hidden)]
    args += [dwp["w"], dwp["bias"].reshape(1, 1, 1, hidden),
             proj["w"], proj["bias"].reshape(1, Cout)]

    if stride == 1:
        pad_shape = (N, H + 2, W + 2, hidden)
    else:
        pad_shape = (2, N, H // 2 + 1, 2 * Wo + 1, hidden)

    kernel = _make_block_kernel(N, H, W, hidden, stride, has_expand, identity)
    in_specs = [pl.BlockSpec(a.shape, lambda i, nd=a.ndim: (0,) * nd) for a in args]
    out = pl.pallas_call(
        kernel,
        out_shape=jax.ShapeDtypeStruct((N * Ho * Wo, Cout), ACT_DTYPE),
        grid=(1,),
        in_specs=in_specs,
        out_specs=pl.BlockSpec((N * Ho * Wo, Cout), lambda i: (0, 0)),
        scratch_shapes=[pltpu.VMEM((N * H * W, hidden), jnp.float32),   # expand output
                        pltpu.VMEM(pad_shape, jnp.float32),             # padded taps
                        pltpu.VMEM((N * Ho * Wo, hidden), MXU_DTYPE)],  # dw output (2D)
        compiler_params=pltpu.CompilerParams(
            dimension_semantics=("arbitrary",),
            vmem_limit_bytes=VMEM_LIMIT),
    )(*args)
    return out.reshape(N, Ho, Wo, Cout)


# ----------------------------------------------------------------------------
# Plain conv wrappers (stem / neck / deconv / heads: tiny layers, XLA-side im2col)
# ----------------------------------------------------------------------------
def _im2col(x, k, stride, pad):
    n, h, w, c = x.shape
    xp = jnp.pad(x, ((0, 0), (pad, pad), (pad, pad), (0, 0)))
    ho = (h + 2 * pad - k) // stride + 1
    wo = (w + 2 * pad - k) // stride + 1
    cols = []
    for di in range(k):
        for dj in range(k):
            patch = lax.slice(
                xp, (0, di, dj, 0),
                (n, di + stride * (ho - 1) + 1, dj + stride * (wo - 1) + 1, c),
                (1, stride, stride, 1))
            cols.append(patch)
    cols = jnp.concatenate(cols, axis=-1)
    return cols.reshape(n * ho * wo, k * k * c), (n, ho, wo)


def conv2d_fused(x, op, out_dtype=ACT_DTYPE):
    k, stride, pad = op["k"], op["stride"], op["pad"]
    if k == 1 and stride == 1 and pad == 0:
        n, h, w, c = x.shape
        cols, dims = x.reshape(n * h * w, c), (n, h, w)
    else:
        cols, dims = _im2col(x, k, stride, pad)
    y = pallas_matmul_fused(cols, op["w"], op["bias"], op["act"], out_dtype)
    n, ho, wo = dims
    return y.reshape(n, ho, wo, op["cout"])


def deconv4x4_s2_fused(x, op, out_dtype=ACT_DTYPE):
    """ConvTranspose2d(C,C,4,2,1)+BN+ReLU via the 4-phase sub-pixel decomposition:
    one 3x3 conv (stride 1, pad 1) with a phase-combined (3,3,C,4C) weight + pixel shuffle."""
    n, h, w, _ = x.shape
    cout = op["cout"]
    cols, _ = _im2col(x, 3, 1, 1)
    y = pallas_matmul_fused(cols, op["w"], op["bias"], op["act"], out_dtype)
    y = y.reshape(n, h, w, 2, 2, cout).transpose(0, 1, 3, 2, 4, 5)
    return y.reshape(n, 2 * h, 2 * w, cout)


# ----------------------------------------------------------------------------
# Parameter construction (deterministic, mirrors the PyTorch module's shapes)
# ----------------------------------------------------------------------------
def _make_divisible(v, divisor=8, min_value=None):
    if min_value is None:
        min_value = divisor
    new_v = max(min_value, int(v + divisor / 2) // divisor * divisor)
    if new_v < 0.9 * v:
        new_v += divisor
    return new_v


class _RNG:
    def __init__(self, seed):
        self.key = jax.random.PRNGKey(seed)

    def next(self):
        self.key, k = jax.random.split(self.key)
        return k


def _conv_params(rng, cin, cout, k, stride, pad, act, use_bn=True):
    std = math.sqrt(2.0 / (k * k * cout))
    w = jax.random.normal(rng.next(), (k, k, cin, cout), jnp.float32) * std
    scale = BN_SCALE if use_bn else 1.0                 # BN scale folded into the weight
    w = (w * scale).reshape(k * k * cin, cout).astype(MXU_DTYPE)
    return {"w": w, "bias": jnp.zeros((cout,), jnp.float32), "act": act,
            "k": k, "stride": stride, "pad": pad, "cout": cout}


def _dw_params(rng, c, stride):
    std = math.sqrt(2.0 / (9 * c))
    w = jax.random.normal(rng.next(), (3, 3, c), jnp.float32) * std
    return {"w": (w * BN_SCALE).reshape(9, 1, 1, 1, c),
            "bias": jnp.zeros((c,), jnp.float32), "stride": stride}


def _deconv_params(rng, c):
    # TODO(synk): weights are generated directly in HWIO; loading trained PyTorch
    #             ConvTranspose2d weights would need the (in,out,kh,kw) re-layout.
    std = math.sqrt(2.0 / (16 * c))
    w4 = jax.random.normal(rng.next(), (4, 4, c, c), jnp.float32) * std
    conv_bias = jax.random.normal(rng.next(), (c,), jnp.float32) * 0.01
    # phase parity -> {window offset within the 3x3 padded window : 4x4 kernel tap}
    tap_map = {0: {0: 3, 1: 1}, 1: {1: 2, 2: 0}}
    wc = jnp.zeros((3, 3, c, 4 * c), jnp.float32)
    for py in (0, 1):
        for px in (0, 1):
            g = py * 2 + px
            for dy, ky in tap_map[py].items():
                for dx, kx in tap_map[px].items():
                    wc = wc.at[dy, dx, :, g * c:(g + 1) * c].set(w4[ky, kx])
    return {"w": (wc * BN_SCALE).reshape(9 * c, 4 * c).astype(MXU_DTYPE),
            "bias": jnp.tile(BN_SCALE * conv_bias, 4),
            "act": "relu", "cout": c,
            "w4": w4, "conv_bias": conv_bias}


def build_posmobile_params(seed, heads, width_mult=0.5):
    rng = _RNG(seed)
    cfgs = [[1, 16, 1, 1], [6, 24, 2, 2], [6, 32, 3, 2], [6, 64, 4, 2],
            [6, 96, 3, 1], [6, 160, 3, 2], [6, 320, 1, 1]]
    input_channel = _make_divisible(32 * width_mult, 8)
    stem = _conv_params(rng, 3, input_channel, 3, 2, 1, "relu6")

    blocks = []
    for t, c, n, s in cfgs:
        oc = _make_divisible(c * width_mult, 8)
        for i in range(n):
            stride = s if i == 0 else 1
            hidden = round(input_channel * t)
            blk = {
                "identity": stride == 1 and input_channel == oc,
                "expand": None if t == 1 else
                          _conv_params(rng, input_channel, hidden, 1, 1, 0, "relu6"),
                "dw": _dw_params(rng, hidden, stride),
                "project": _conv_params(rng, hidden, oc, 1, 1, 0, "none"),
            }
            blocks.append(blk)
            input_channel = oc

    inplanes = int(320 * width_mult)
    inplanes_list = [inplanes, inplanes // 2, inplanes // 2]
    filters = [inplanes // 2, inplanes // 2, 64]
    neck = []
    for i in range(3):
        neck.append({"conv": _conv_params(rng, inplanes_list[i], filters[i], 3, 1, 1, "relu"),
                     "deconv": _deconv_params(rng, filters[i])})

    head_conv = int(256 * width_mult)
    head_order = list(heads.keys())
    n_heads = len(head_order)
    std3 = math.sqrt(2.0 / (9 * head_conv))
    w3 = jnp.concatenate(
        [jax.random.normal(rng.next(), (3, 3, 64, head_conv), jnp.float32) * std3
         for _ in head_order], axis=-1)
    head3 = {"w": w3.reshape(9 * 64, n_heads * head_conv).astype(MXU_DTYPE),
             "bias": jnp.zeros((n_heads * head_conv,), jnp.float32),
             "act": "relu", "k": 3, "stride": 1, "pad": 1,
             "cout": n_heads * head_conv}
    total_classes = sum(heads[h] for h in head_order)
    w1 = jnp.zeros((n_heads * head_conv, total_classes), jnp.float32)
    off = 0
    for hi, name in enumerate(head_order):
        cls = heads[name]
        std1 = math.sqrt(2.0 / cls)
        wh = jax.random.normal(rng.next(), (head_conv, cls), jnp.float32) * std1
        w1 = w1.at[hi * head_conv:(hi + 1) * head_conv, off:off + cls].set(wh)
        off += cls
    head1 = {"w": w1.astype(MXU_DTYPE),
             "bias": jnp.zeros((total_classes,), jnp.float32)}

    return {"stem": stem, "blocks": blocks, "neck": neck,
            "head3": head3, "head1": head1,
            "head_order": head_order, "head_classes": dict(heads)}


# ----------------------------------------------------------------------------
# Forward
# ----------------------------------------------------------------------------
def pos_mobile_forward(params, x_nchw):
    # Accept NCHW like PyTorch, compute in NHWC (bf16 storage), return NCHW f32.
    x = jnp.transpose(x_nchw, (0, 2, 3, 1)).astype(ACT_DTYPE)
    x = conv2d_fused(x, params["stem"])
    for blk in params["blocks"]:
        x = run_block_fused(x, blk)
    for stage in params["neck"]:
        x = conv2d_fused(x, stage["conv"])
        x = deconv4x4_s2_fused(x, stage["deconv"])
    h = conv2d_fused(x, params["head3"])                        # merged 3x3 + ReLU
    n, ho, wo, ch = h.shape
    y = pallas_matmul_fused(h.reshape(n * ho * wo, ch), params["head1"]["w"],
                            params["head1"]["bias"], "none", jnp.float32)
    y = y.reshape(n, ho, wo, -1)
    outs, off = [], 0
    for name in params["head_order"]:
        cls = params["head_classes"][name]
        outs.append(jnp.transpose(y[..., off:off + cls], (0, 3, 1, 2)))
        off += cls
    return outs


# ----------------------------------------------------------------------------
# Numerical self-checks against plain-JAX f32 references (review correctness concern)
# ----------------------------------------------------------------------------
def _block_reference(x_f32, blk):
    hidden = blk["dw"]["w"].shape[-1]
    s = blk["dw"]["stride"]
    y = x_f32
    if blk["expand"] is not None:
        we = blk["expand"]["w"].astype(jnp.float32)
        y = _relu6(jnp.einsum("nhwc,cd->nhwd", y, we) + blk["expand"]["bias"])
    wd = blk["dw"]["w"].astype(jnp.float32).reshape(3, 3, 1, hidden)
    y = lax.conv_general_dilated(y, wd, window_strides=(s, s),
                                 padding=[(1, 1), (1, 1)],
                                 dimension_numbers=("NHWC", "HWIO", "NHWC"),
                                 feature_group_count=hidden)
    y = _relu6(y + blk["dw"]["bias"])
    y = jnp.einsum("nhwc,cd->nhwd", y, blk["project"]["w"].astype(jnp.float32))
    y = y + blk["project"]["bias"]
    if blk["identity"]:
        y = y + x_f32
    return y


def _deconv_reference(x_f32, dc):
    w4 = dc["w4"]
    y = lax.conv_general_dilated(x_f32, w4[::-1, ::-1, :, :],
                                 window_strides=(1, 1), padding=[(2, 2), (2, 2)],
                                 lhs_dilation=(2, 2),
                                 dimension_numbers=("NHWC", "HWIO", "NHWC"))
    y = (y + dc["conv_bias"]) * BN_SCALE
    return jnp.maximum(y, 0.0)


def _assert_close(out, ref, tag):
    err = float(jnp.max(jnp.abs(out - ref)))
    scale = float(jnp.max(jnp.abs(ref))) + 1e-6
    assert err <= 0.05 * scale + 0.05, f"{tag} mismatch: err={err}, scale={scale}"


def _self_check(params):
    key = jax.random.PRNGKey(1)
    k1, k2, k3 = jax.random.split(key, 3)

    blk_s2 = next(b for b in params["blocks"] if b["dw"]["stride"] == 2)
    blk_id = next(b for b in params["blocks"] if b["identity"])
    for blk, kk, tag in ((blk_s2, k1, "block_s2"), (blk_id, k2, "block_id")):
        cin = (blk["expand"]["w"].shape[0] if blk["expand"] is not None
               else blk["dw"]["w"].shape[-1])
        x = jax.random.normal(kk, (2, 8, 8, cin), jnp.float32).astype(ACT_DTYPE)
        out = run_block_fused(x, blk).astype(jnp.float32)
        ref = _block_reference(x.astype(jnp.float32), blk)
        _assert_close(out, ref, tag)

    dc = _deconv_params(_RNG(123), 16)
    x = jax.random.normal(k3, (2, 8, 8, 16), jnp.float32).astype(ACT_DTYPE)
    out = deconv4x4_s2_fused(x, dc).astype(jnp.float32)
    ref = _deconv_reference(x.astype(jnp.float32), dc)
    _assert_close(out, ref, "deconv")


if __name__ == "__main__":
    # Default heads='' would produce an empty output list; use a small head dict instead.
    heads = {"hm": 2, "wh": 2}
    params = build_posmobile_params(seed=0, heads=heads)

    # Numerically verify the fused block kernels (stride 1 + identity, stride 2) and the
    # 4-phase deconv decomposition against plain-JAX f32 references.
    _self_check(params)

    key = jax.random.PRNGKey(0)
    x = jax.random.normal(key, (2, 3, 64, 64), jnp.float32)     # NCHW, H,W divisible by 32

    fwd = jax.jit(lambda inp: pos_mobile_forward(params, inp))
    outs = fwd(x)
    for o in outs:
        jax.block_until_ready(o)

    assert len(outs) == 2
    assert outs[0].shape == (2, 2, 16, 16) and outs[1].shape == (2, 2, 16, 16)
    assert all(bool(jnp.all(jnp.isfinite(o))) for o in outs)
    print("KERNEL_OK")
</pallas_src>

<mosaic_0001>
module attributes {stable_mosaic.version = 11 : i64} {
  func.func @kernel(%arg0: i32, %arg1: memref<128x8xbf16, #tpu.memory_space<vmem>>, %arg2: memref<8x48xbf16, #tpu.memory_space<vmem>>, %arg3: memref<1x48xf32, #tpu.memory_space<vmem>>, %arg4: memref<9x1x1x1x48xf32, #tpu.memory_space<vmem>>, %arg5: memref<1x1x1x48xf32, #tpu.memory_space<vmem>>, %arg6: memref<48x16xbf16, #tpu.memory_space<vmem>>, %arg7: memref<1x16xf32, #tpu.memory_space<vmem>>, %arg8: memref<32x16xbf16, #tpu.memory_space<vmem>>, %arg9: memref<128x48xf32, #tpu.memory_space<vmem>>, %arg10: memref<2x2x5x9x48xf32, #tpu.memory_space<vmem>>, %arg11: memref<32x48xbf16, #tpu.memory_space<vmem>>) attributes {dimension_semantics = [#tpu.dimension_semantics<arbitrary>], iteration_bounds = array<i64: 1>, scalar_prefetch = 0 : i64, scratch_operands = 3 : i64, tpu.core_type = #tpu.core_type<tc>, window_params = [{pipeline_mode = #tpu.pipeline_mode<synchronous>, transform_indices = @transform_0, window_bounds = array<i64: 128, 8>}, {pipeline_mode = #tpu.pipeline_mode<synchronous>, transform_indices = @transform_1, window_bounds = array<i64: 8, 48>}, {pipeline_mode = #tpu.pipeline_mode<synchronous>, transform_indices = @transform_2, window_bounds = array<i64: 1, 48>}, {pipeline_mode = #tpu.pipeline_mode<synchronous>, transform_indices = @transform_3, window_bounds = array<i64: 9, 1, 1, 1, 48>}, {pipeline_mode = #tpu.pipeline_mode<synchronous>, transform_indices = @transform_4, window_bounds = array<i64: 1, 1, 1, 48>}, {pipeline_mode = #tpu.pipeline_mode<synchronous>, transform_indices = @transform_5, window_bounds = array<i64: 48, 16>}, {pipeline_mode = #tpu.pipeline_mode<synchronous>, transform_indices = @transform_6, window_bounds = array<i64: 1, 16>}, {pipeline_mode = #tpu.pipeline_mode<synchronous>, transform_indices = @transform_7, window_bounds = array<i64: 32, 16>}]} {
    %c0 = arith.constant 0 : index
    %c0_0 = arith.constant 0 : index
    %0 = vector.load %arg1[%c0, %c0_0] : memref<128x8xbf16, #tpu.memory_space<vmem>>, vector<128x8xbf16>
    %c0_1 = arith.constant 0 : index
    %c0_2 = arith.constant 0 : index
    %1 = vector.load %arg2[%c0_1, %c0_2] : memref<8x48xbf16, #tpu.memory_space<vmem>>, vector<8x48xbf16>
    %cst = arith.constant dense<0.000000e+00> : vector<128x48xf32>
    %2 = tpu.matmul %0, %1, %cst {dimension_numbers = #tpu.dot_dimension_numbers<[1], [0], [0], [1], [0, 0, 1, 1], [], []>} : vector<128x8xbf16>, vector<8x48xbf16>, vector<128x48xf32> -> vector<128x48xf32>
    %c0_3 = arith.constant 0 : index
    %c0_4 = arith.constant 0 : index
    %3 = vector.load %arg3[%c0_3, %c0_4] : memref<1x48xf32, #tpu.memory_space<vmem>>, vector<1x48xf32>
    %4 = vector.broadcast %3 : vector<1x48xf32> to vector<128x48xf32>
    %5 = arith.addf %2, %4 : vector<128x48xf32>
    %cst_5 = arith.constant 0.000000e+00 : f32
    %6 = vector.broadcast %cst_5 : f32 to vector<128x48xf32>
    %7 = arith.maximumf %5, %6 : vector<128x48xf32>
    %cst_6 = arith.constant 6.000000e+00 : f32
    %8 = vector.broadcast %cst_6 : f32 to vector<128x48xf32>
    %9 = arith.minimumf %7, %8 : vector<128x48xf32>
    %c0_7 = arith.constant 0 : index
    %c0_8 = arith.constant 0 : index
    %10 = vector.load %arg9[%c0_7, %c0_8] : memref<128x48xf32, #tpu.memory_space<vmem>>, vector<128x48xf32>
    tpu.vector_store %arg9[%c0_7, %c0_8], %9 {strides = array<i32>} : memref<128x48xf32, #tpu.memory_space<vmem>>, vector<128x48xf32>,
    %cst_9 = arith.constant 0.000000e+00 : f32
    %11 = vector.broadcast %cst_9 : f32 to vector<2x2x5x9x48xf32>
    %c0_10 = arith.constant 0 : index
    %c0_11 = arith.constant 0 : index
    %c0_12 = arith.constant 0 : index
    %c0_13 = arith.constant 0 : index
    %c0_14 = arith.constant 0 : index
    %12 = vector.load %arg10[%c0_10, %c0_11, %c0_12, %c0_13, %c0_14] : memref<2x2x5x9x48xf32, #tpu.memory_space<vmem>>, vector<2x2x5x9x48xf32>
    tpu.vector_store %arg10[%c0_10, %c0_11, %c0_12, %c0_13, %c0_14], %11 {strides = array<i32>} : memref<2x2x5x9x48xf32, #tpu.memory_space<vmem>>, vector<2x2x5x9x48xf32>,
    %c0_15 = arith.constant 0 : index
    %c0_16 = arith.constant 0 : index
    %13 = vector.load %arg9[%c0_15, %c0_16] : memref<128x48xf32, #tpu.memory_space<vmem>>, vector<8x48xf32>
    %c1 = arith.constant 1 : index
    %c0_17 = arith.constant 0 : index
    %c0_18 = arith.constant 0 : index
    %c1_19 = arith.constant 1 : index
    %c0_20 = arith.constant 0 : index
    %14 = vector.load %arg10[%c1, %c0_17, %c0_18, %c1_19, %c0_20] : memref<2x2x5x9x48xf32, #tpu.memory_space<vmem>>, vector<1x1x1x8x48xf32>
    %15 = vector.shape_cast %14 : vector<1x1x1x8x48xf32> to vector<8x48xf32>
    %16 = vector.shape_cast %13 : vector<8x48xf32> to vector<1x1x1x8x48xf32>
    tpu.vector_store %arg10[%c1, %c0_17, %c0_18, %c1_19, %c0_20], %16 {strides = array<i32>} : memref<2x2x5x9x48xf32, #tpu.memory_space<vmem>>, vector<1x1x1x8x48xf32>,
    %c8 = arith.constant 8 : index
    %c0_21 = arith.constant 0 : index
    %17 = vector.load %arg9[%c8, %c0_21] : memref<128x48xf32, #tpu.memory_space<vmem>>, vector<8x48xf32>
    %c0_22 = arith.constant 0 : index
    %c0_23 = arith.constant 0 : index
    %c1_24 = arith.constant 1 : index
    %c1_25 = arith.constant 1 : index
    %c0_26 = arith.constant 0 : index
    %18 = vector.load %arg10[%c0_22, %c0_23, %c1_24, %c1_25, %c0_26] : memref<2x2x5x9x48xf32, #tpu.memory_space<vmem>>, vector<1x1x1x8x48xf32>
    %19 = vector.shape_cast %18 : vector<1x1x1x8x48xf32> to vector<8x48xf32>
    %20 = vector.shape_cast %17 : vector<8x48xf32> to vector<1x1x1x8x48xf32>
    tpu.vector_store %arg10[%c0_22, %c0_23, %c1_24, %c1_25, %c0_26], %20 {strides = array<i32>} : memref<2x2x5x9x48xf32, #tpu.memory_space<vmem>>, vector<1x1x1x8x48xf32>,
    %c16 = arith.constant 16 : index
    %c0_27 = arith.constant 0 : index
    %21 = vector.load %arg9[%c16, %c0_27] : memref<128x48xf32, #tpu.memory_space<vmem>>, vector<8x48xf32>
    %c1_28 = arith.constant 1 : index
    %c0_29 = arith.constant 0 : index
    %c1_30 = arith.constant 1 : index
    %c1_31 = arith.constant 1 : index
    %c0_32 = arith.constant 0 : index
    %22 = vector.load %arg10[%c1_28, %c0_29, %c1_30, %c1_31, %c0_32] : memref<2x2x5x9x48xf32, #tpu.memory_space<vmem>>, vector<1x1x1x8x48xf32>
    %23 = vector.shape_cast %22 : vector<1x1x1x8x48xf32> to vector<8x48xf32>
    %24 = vector.shape_cast %21 : vector<8x48xf32> to vector<1x1x1x8x48xf32>
    tpu.vector_store %arg10[%c1_28, %c0_29, %c1_30, %c1_31, %c0_32], %24 {strides = array<i32>} : memref<2x2x5x9x48xf32, #tpu.memory_space<vmem>>, vector<1x1x1x8x48xf32>,
    %c24 = arith.constant 24 : index
    %c0_33 = arith.constant 0 : index
    %25 = vector.load %arg9[%c24, %c0_33] : memref<128x48xf32, #tpu.memory_space<vmem>>, vector<8x48xf32>
    %c0_34 = arith.constant 0 : index
    %c0_35 = arith.constant 0 : index
    %c2 = arith.constant 2 : index
    %c1_36 = arith.constant 1 : index
    %c0_37 = arith.constant 0 : index
    %26 = vector.load %arg10[%c0_34, %c0_35, %c2, %c1_36, %c0_37] : memref<2x2x5x9x48xf32, #tpu.memory_space<vmem>>, vector<1x1x1x8x48xf32>
    %27 = vector.shape_cast %26 : vector<1x1x1x8x48xf32> to vector<8x48xf32>
    %28 = vector.shape_cast %25 : vector<8x48xf32> to vector<1x1x1x8x48xf32>
    tpu.vector_store %arg10[%c0_34, %c0_35, %c2, %c1_36, %c0_37], %28 {strides = array<i32>} : memref<2x2x5x9x48xf32, #tpu.memory_space<vmem>>, vector<1x1x1x8x48xf32>,
    %c32 = arith.constant 32 : index
    %c0_38 = arith.constant 0 : index
    %29 = vector.load %arg9[%c32, %c0_38] : memref<128x48xf32, #tpu.memory_space<vmem>>, vector<8x48xf32>
    %c1_39 = arith.constant 1 : index
    %c0_40 = arith.constant 0 : index
    %c2_41 = arith.constant 2 : index
    %c1_42 = arith.constant 1 : index
    %c0_43 = arith.constant 0 : index
    %30 = vector.load %arg10[%c1_39, %c0_40, %c2_41, %c1_42, %c0_43] : memref<2x2x5x9x48xf32, #tpu.memory_space<vmem>>, vector<1x1x1x8x48xf32>
    %31 = vector.shape_cast %30 : vector<1x1x1x8x48xf32> to vector<8x48xf32>
    %32 = vector.shape_cast %29 : vector<8x48xf32> to vector<1x1x1x8x48xf32>
    tpu.vector_store %arg10[%c1_39, %c0_40, %c2_41, %c1_42, %c0_43], %32 {strides = array<i32>} : memref<2x2x5x9x48xf32, #tpu.memory_space<vmem>>, vector<1x1x1x8x48xf32>,
    %c40 = arith.constant 40 : index
    %c0_44 = arith.constant 0 : index
    %33 = vector.load %arg9[%c40, %c0_44] : memref<128x48xf32, #tpu.memory_space<vmem>>, vector<8x48xf32>
    %c0_45 = arith.constant 0 : index
    %c0_46 = arith.constant 0 : index
    %c3 = arith.constant 3 : index
    %c1_47 = arith.constant 1 : index
    %c0_48 = arith.constant 0 : index
    %34 = vector.load %arg10[%c0_45, %c0_46, %c3, %c1_47, %c0_48] : memref<2x2x5x9x48xf32, #tpu.memory_space<vmem>>, vector<1x1x1x8x48xf32>
    %35 = vector.shape_cast %34 : vector<1x1x1x8x48xf32> to vector<8x48xf32>
    %36 = vector.shape_cast %33 : vector<8x48xf32> to vector<1x1x1x8x48xf32>
    tpu.vector_store %arg10[%c0_45, %c0_46, %c3, %c1_47, %c0_48], %36 {strides = array<i32>} : memref<2x2x5x9x48xf32, #tpu.memory_space<vmem>>, vector<1x1x1x8x48xf32>,
    %c48 = arith.constant 48 : index
    %c0_49 = arith.constant 0 : index
    %37 = vector.load %arg9[%c48, %c0_49] : memref<128x48xf32, #tpu.memory_space<vmem>>, vector<8x48xf32>
    %c1_50 = arith.constant 1 : index
    %c0_51 = arith.constant 0 : index
    %c3_52 = arith.constant 3 : index
    %c1_53 = arith.constant 1 : index
    %c0_54 = arith.constant 0 : index
    %38 = vector.load %arg10[%c1_50, %c0_51, %c3_52, %c1_53, %c0_54] : memref<2x2x5x9x48xf32, #tpu.memory_space<vmem>>, vector<1x1x1x8x48xf32>
    %39 = vector.shape_cast %38 : vector<1x1x1x8x48xf32> to vector<8x48xf32>
    %40 = vector.shape_cast %37 : vector<8x48xf32> to vector<1x1x1x8x48xf32>
    tpu.vector_store %arg10[%c1_50, %c0_51, %c3_52, %c1_53, %c0_54], %40 {strides = array<i32>} : memref<2x2x5x9x48xf32, #tpu.memory_space<vmem>>, vector<1x1x1x8x48xf32>,
    %c56 = arith.constant 56 : index
    %c0_55 = arith.constant 0 : index
    %41 = vector.load %arg9[%c56, %c0_55] : memref<128x48xf32, #tpu.memory_space<vmem>>, vector<8x48xf32>
    %c0_56 = arith.constant 0 : index
    %c0_57 = arith.constant 0 : index
    %c4 = arith.constant 4 : index
    %c1_58 = arith.constant 1 : index
    %c0_59 = arith.constant 0 : index
    %42 = vector.load %arg10[%c0_56, %c0_57, %c4, %c1_58, %c0_59] : memref<2x2x5x9x48xf32, #tpu.memory_space<vmem>>, vector<1x1x1x8x48xf32>
    %43 = vector.shape_cast %42 : vector<1x1x1x8x48xf32> to vector<8x48xf32>
    %44 = vector.shape_cast %41 : vector<8x48xf32> to vector<1x1x1x8x48xf32>
    tpu.vector_store %arg10[%c0_56, %c0_57, %c4, %c1_58, %c0_59], %44 {strides = array<i32>} : memref<2x2x5x9x48xf32, #tpu.memory_space<vmem>>, vector<1x1x1x8x48xf32>,
    %c64 = arith.constant 64 : index
    %c0_60 = arith.constant 0 : index
    %45 = vector.load %arg9[%c64, %c0_60] : memref<128x48xf32, #tpu.memory_space<vmem>>, vector<8x48xf32>
    %c1_61 = arith.constant 1 : index
    %c1_62 = arith.constant 1 : index
    %c0_63 = arith.constant 0 : index
    %c1_64 = arith.constant 1 : index
    %c0_65 = arith.constant 0 : index
    %46 = vector.load %arg10[%c1_61, %c1_62, %c0_63, %c1_64, %c0_65] : memref<2x2x5x9x48xf32, #tpu.memory_space<vmem>>, vector<1x1x1x8x48xf32>
    %47 = vector.shape_cast %46 : vector<1x1x1x8x48xf32> to vector<8x48xf32>
    %48 = vector.shape_cast %45 : vector<8x48xf32> to vector<1x1x1x8x48xf32>
    tpu.vector_store %arg10[%c1_61, %c1_62, %c0_63, %c1_64, %c0_65], %48 {strides = array<i32>} : memref<2x2x5x9x48xf32, #tpu.memory_space<vmem>>, vector<1x1x1x8x48xf32>,
    %c72 = arith.constant 72 : index
    %c0_66 = arith.constant 0 : index
    %49 = vector.load %arg9[%c72, %c0_66] : memref<128x48xf32, #tpu.memory_space<vmem>>, vector<8x48xf32>
    %c0_67 = arith.constant 0 : index
    %c1_68 = arith.constant 1 : index
    %c1_69 = arith.constant 1 : index
    %c1_70 = arith.constant 1 : index
    %c0_71 = arith.constant 0 : index
    %50 = vector.load %arg10[%c0_67, %c1_68, %c1_69, %c1_70, %c0_71] : memref<2x2x5x9x48xf32, #tpu.memory_space<vmem>>, vector<1x1x1x8x48xf32>
    %51 = vector.shape_cast %50 : vector<1x1x1x8x48xf32> to vector<8x48xf32>
    %52 = vector.shape_cast %49 : vector<8x48xf32> to vector<1x1x1x8x48xf32>
    tpu.vector_store %arg10[%c0_67, %c1_68, %c1_69, %c1_70, %c0_71], %52 {strides = array<i32>} : memref<2x2x5x9x48xf32, #tpu.memory_space<vmem>>, vector<1x1x1x8x48xf32>,
    %c80 = arith.constant 80 : index
    %c0_72 = arith.constant 0 : index
    %53 = vector.load %arg9[%c80, %c0_72] : memref<128x48xf32, #tpu.memory_space<vmem>>, vector<8x48xf32>
    %c1_73 = arith.constant 1 : index
    %c1_74 = arith.constant 1 : index
    %c1_75 = arith.constant 1 : index
    %c1_76 = arith.constant 1 : index
    %c0_77 = arith.constant 0 : index
    %54 = vector.load %arg10[%c1_73, %c1_74, %c1_75, %c1_76, %c0_77] : memref<2x2x5x9x48xf32, #tpu.memory_space<vmem>>, vector<1x1x1x8x48xf32>
    %55 = vector.shape_cast %54 : vector<1x1x1x8x48xf32> to vector<8x48xf32>
    %56 = vector.shape_cast %53 : vector<8x48xf32> to vector<1x1x1x8x48xf32>
    tpu.vector_store %arg10[%c1_73, %c1_74, %c1_75, %c1_76, %c0_77], %56 {strides = array<i32>} : memref<2x2x5x9x48xf32, #tpu.memory_space<vmem>>, vector<1x1x1x8x48xf32>,
    %c88 = arith.constant 88 : index
    %c0_78 = arith.constant 0 : index
    %57 = vector.load %arg9[%c88, %c0_78] : memref<128x48xf32, #tpu.memory_space<vmem>>, vector<8x48xf32>
    %c0_79 = arith.constant 0 : index
    %c1_80 = arith.constant 1 : index
    %c2_81 = arith.constant 2 : index
    %c1_82 = arith.constant 1 : index
    %c0_83 = arith.constant 0 : index
    %58 = vector.load %arg10[%c0_79, %c1_80, %c2_81, %c1_82, %c0_83] : memref<2x2x5x9x48xf32, #tpu.memory_space<vmem>>, vector<1x1x1x8x48xf32>
    %59 = vector.shape_cast %58 : vector<1x1x1x8x48xf32> to vector<8x48xf32>
    %60 = vector.shape_cast %57 : vector<8x48xf32> to vector<1x1x1x8x48xf32>
    tpu.vector_store %arg10[%c0_79, %c1_80, %c2_81, %c1_82, %c0_83], %60 {strides = array<i32>} : memref<2x2x5x9x48xf32, #tpu.memory_space<vmem>>, vector<1x1x1x8x48xf32>,
    %c96 = arith.constant 96 : index
    %c0_84 = arith.constant 0 : index
    %61 = vector.load %arg9[%c96, %c0_84] : memref<128x48xf32, #tpu.memory_space<vmem>>, vector<8x48xf32>
    %c1_85 = arith.constant 1 : index
    %c1_86 = arith.constant 1 : index
    %c2_87 = arith.constant 2 : index
    %c1_88 = arith.constant 1 : index
    %c0_89 = arith.constant 0 : index
    %62 = vector.load %arg10[%c1_85, %c1_86, %c2_87, %c1_88, %c0_89] : memref<2x2x5x9x48xf32, #tpu.memory_space<vmem>>, vector<1x1x1x8x48xf32>
    %63 = vector.shape_cast %62 : vector<1x1x1x8x48xf32> to vector<8x48xf32>
    %64 = vector.shape_cast %61 : vector<8x48xf32> to vector<1x1x1x8x48xf32>
    tpu.vector_store %arg10[%c1_85, %c1_86, %c2_87, %c1_88, %c0_89], %64 {strides = array<i32>} : memref<2x2x5x9x48xf32, #tpu.memory_space<vmem>>, vector<1x1x1x8x48xf32>,
    %c104 = arith.constant 104 : index
    %c0_90 = arith.constant 0 : index
    %65 = vector.load %arg9[%c104, %c0_90] : memref<128x48xf32, #tpu.memory_space<vmem>>, vector<8x48xf32>
    %c0_91 = arith.constant 0 : index
    %c1_92 = arith.constant 1 : index
    %c3_93 = arith.constant 3 : index
    %c1_94 = arith.constant 1 : index
    %c0_95 = arith.constant 0 : index
    %66 = vector.load %arg10[%c0_91, %c1_92, %c3_93, %c1_94, %c0_95] : memref<2x2x5x9x48xf32, #tpu.memory_space<vmem>>, vector<1x1x1x8x48xf32>
    %67 = vector.shape_cast %66 : vector<1x1x1x8x48xf32> to vector<8x48xf32>
    %68 = vector.shape_cast %65 : vector<8x48xf32> to vector<1x1x1x8x48xf32>
    tpu.vector_store %arg10[%c0_91, %c1_92, %c3_93, %c1_94, %c0_95], %68 {strides = array<i32>} : memref<2x2x5x9x48xf32, #tpu.memory_space<vmem>>, vector<1x1x1x8x48xf32>,
    %c112 = arith.constant 112 : index
    %c0_96 = arith.constant 0 : index
    %69 = vector.load %arg9[%c112, %c0_96] : memref<128x48xf32, #tpu.memory_space<vmem>>, vector<8x48xf32>
    %c1_97 = arith.constant 1 : index
    %c1_98 = arith.constant 1 : index
    %c3_99 = arith.constant 3 : index
    %c1_100 = arith.constant 1 : index
    %c0_101 = arith.constant 0 : index
    %70 = vector.load %arg10[%c1_97, %c1_98, %c3_99, %c1_100, %c0_101] : memref<2x2x5x9x48xf32, #tpu.memory_space<vmem>>, vector<1x1x1x8x48xf32>
    %71 = vector.shape_cast %70 : vector<1x1x1x8x48xf32> to vector<8x48xf32>
    %72 = vector.shape_cast %69 : vector<8x48xf32> to vector<1x1x1x8x48xf32>
    tpu.vector_store %arg10[%c1_97, %c1_98, %c3_99, %c1_100, %c0_101], %72 {strides = array<i32>} : memref<2x2x5x9x48xf32, #tpu.memory_space<vmem>>, vector<1x1x1x8x48xf32>,
    %c120 = arith.constant 120 : index
    %c0_102 = arith.constant 0 : index
    %73 = vector.load %arg9[%c120, %c0_102] : memref<128x48xf32, #tpu.memory_space<vmem>>, vector<8x48xf32>
    %c0_103 = arith.constant 0 : index
    %c1_104 = arith.constant 1 : index
    %c4_105 = arith.constant 4 : index
    %c1_106 = arith.constant 1 : index
    %c0_107 = arith.constant 0 : index
    %74 = vector.load %arg10[%c0_103, %c1_104, %c4_105, %c1_106, %c0_107] : memref<2x2x5x9x48xf32, #tpu.memory_space<vmem>>, vector<1x1x1x8x48xf32>
    %75 = vector.shape_cast %74 : vector<1x1x1x8x48xf32> to vector<8x48xf32>
    %76 = vector.shape_cast %73 : vector<8x48xf32> to vector<1x1x1x8x48xf32>
    tpu.vector_store %arg10[%c0_103, %c1_104, %c4_105, %c1_106, %c0_107], %76 {strides = array<i32>} : memref<2x2x5x9x48xf32, #tpu.memory_space<vmem>>, vector<1x1x1x8x48xf32>,
    %c0_108 = arith.constant 0 : index
    %c0_109 = arith.constant 0 : index
    %c0_110 = arith.constant 0 : index
    %c0_111 = arith.constant 0 : index
    %c0_112 = arith.constant 0 : index
    %77 = vector.load %arg10[%c0_108, %c0_109, %c0_110, %c0_111, %c0_112] : memref<2x2x5x9x48xf32, #tpu.memory_space<vmem>>, vector<1x2x4x4x48xf32>
    %78 = vector.shape_cast %77 : vector<1x2x4x4x48xf32> to vector<2x4x4x48xf32>
    %c0_113 = arith.constant 0 : index
    %c0_114 = arith.constant 0 : index
    %c0_115 = arith.constant 0 : index
    %c5 = arith.constant 5 : index
    %c0_116 = arith.constant 0 : index
    %79 = vector.load %arg10[%c0_113, %c0_114, %c0_115, %c5, %c0_116] : memref<2x2x5x9x48xf32, #tpu.memory_space<vmem>>, vector<1x2x4x4x48xf32>
    %80 = vector.shape_cast %79 : vector<1x2x4x4x48xf32> to vector<2x4x4x48xf32>
    %c0_117 = arith.constant 0 : index
    %c0_118 = arith.constant 0 : index
    %c0_119 = arith.constant 0 : index
    %c1_120 = arith.constant 1 : index
    %c0_121 = arith.constant 0 : index
    %81 = vector.load %arg10[%c0_117, %c0_118, %c0_119, %c1_120, %c0_121] : memref<2x2x5x9x48xf32, #tpu.memory_space<vmem>>, vector<1x2x4x4x48xf32>
    %82 = vector.shape_cast %81 : vector<1x2x4x4x48xf32> to vector<2x4x4x48xf32>
    %c1_122 = arith.constant 1 : index
    %c0_123 = arith.constant 0 : index
    %c0_124 = arith.constant 0 : index
    %c0_125 = arith.constant 0 : index
    %c0_126 = arith.constant 0 : index
    %83 = vector.load %arg10[%c1_122, %c0_123, %c0_124, %c0_125, %c0_126] : memref<2x2x5x9x48xf32, #tpu.memory_space<vmem>>, vector<1x2x4x4x48xf32>
    %84 = vector.shape_cast %83 : vector<1x2x4x4x48xf32> to vector<2x4x4x48xf32>
    %c1_127 = arith.constant 1 : index
    %c0_128 = arith.constant 0 : index
    %c0_129 = arith.constant 0 : index
    %c5_130 = arith.constant 5 : index
    %c0_131 = arith.constant 0 : index
    %85 = vector.load %arg10[%c1_127, %c0_128, %c0_129, %c5_130, %c0_131] : memref<2x2x5x9x48xf32, #tpu.memory_space<vmem>>, vector<1x2x4x4x48xf32>
    %86 = vector.shape_cast %85 : vector<1x2x4x4x48xf32> to vector<2x4x4x48xf32>
    %c1_132 = arith.constant 1 : index
    %c0_133 = arith.constant 0 : index
    %c0_134 = arith.constant 0 : index
    %c1_135 = arith.constant 1 : index
    %c0_136 = arith.constant 0 : index
    %87 = vector.load %arg10[%c1_132, %c0_133, %c0_134, %c1_135, %c0_136] : memref<2x2x5x9x48xf32, #tpu.memory_space<vmem>>, vector<1x2x4x4x48xf32>
    %88 = vector.shape_cast %87 : vector<1x2x4x4x48xf32> to vector<2x4x4x48xf32>
    %c0_137 = arith.constant 0 : index
    %c0_138 = arith.constant 0 : index
    %c1_139 = arith.constant 1 : index
    %c0_140 = arith.constant 0 : index
    %c0_141 = arith.constant 0 : index
    %89 = vector.load %arg10[%c0_137, %c0_138, %c1_139, %c0_140, %c0_141] : memref<2x2x5x9x48xf32, #tpu.memory_space<vmem>>, vector<1x2x4x4x48xf32>
    %90 = vector.shape_cast %89 : vector<1x2x4x4x48xf32> to vector<2x4x4x48xf32>
    %c0_142 = arith.constant 0 : index
    %c0_143 = arith.constant 0 : index
    %c1_144 = arith.constant 1 : index
    %c5_145 = arith.constant 5 : index
    %c0_146 = arith.constant 0 : index
    %91 = vector.load %arg10[%c0_142, %c0_143, %c1_144, %c5_145, %c0_146] : memref<2x2x5x9x48xf32, #tpu.memory_space<vmem>>, vector<1x2x4x4x48xf32>
    %92 = vector.shape_cast %91 : vector<1x2x4x4x48xf32> to vector<2x4x4x48xf32>
    %c0_147 = arith.constant 0 : index
    %c0_148 = arith.constant 0 : index
    %c1_149 = arith.constant 1 : index
    %c1_150 = arith.constant 1 : index
    %c0_151 = arith.constant 0 : index
    %93 = vector.load %arg10[%c0_147, %c0_148, %c1_149, %c1_150, %c0_151] : memref<2x2x5x9x48xf32, #tpu.memory_space<vmem>>, vector<1x2x4x4x48xf32>
    %94 = vector.shape_cast %93 : vector<1x2x4x4x48xf32> to vector<2x4x4x48xf32>
    %c0_152 = arith.constant 0 : index
    %c0_153 = arith.constant 0 : index
    %c0_154 = arith.constant 0 : index
    %c0_155 = arith.constant 0 : index
    %c0_156 = arith.constant 0 : index
    %95 = vector.load %arg4[%c0_152, %c0_153, %c0_154, %c0_155, %c0_156] : memref<9x1x1x1x48xf32, #tpu.memory_space<vmem>>, vector<1x1x1x1x48xf32>
    %96 = vector.shape_cast %95 : vector<1x1x1x1x48xf32> to vector<1x1x1x48xf32>
    %97 = vector.broadcast %96 : vector<1x1x1x48xf32> to vector<2x4x4x48xf32>
    %98 = arith.mulf %78, %97 : vector<2x4x4x48xf32>
    %c1_157 = arith.constant 1 : index
    %c0_158 = arith.constant 0 : index
    %c0_159 = arith.constant 0 : index
    %c0_160 = arith.constant 0 : index
    %c0_161 = arith.constant 0 : index
    %99 = vector.load %arg4[%c1_157, %c0_158, %c0_159, %c0_160, %c0_161] : memref<9x1x1x1x48xf32, #tpu.memory_space<vmem>>, vector<1x1x1x1x48xf32>
    %100 = vector.shape_cast %99 : vector<1x1x1x1x48xf32> to vector<1x1x1x48xf32>
    %101 = vector.broadcast %100 : vector<1x1x1x48xf32> to vector<2x4x4x48xf32>
    %102 = arith.mulf %80, %101 : vector<2x4x4x48xf32>
    %c2_162 = arith.constant 2 : index
    %c0_163 = arith.constant 0 : index
    %c0_164 = arith.constant 0 : index
    %c0_165 = arith.constant 0 : index
    %c0_166 = arith.constant 0 : index
    %103 = vector.load %arg4[%c2_162, %c0_163, %c0_164, %c0_165, %c0_166] : memref<9x1x1x1x48xf32, #tpu.memory_space<vmem>>, vector<1x1x1x1x48xf32>
    %104 = vector.shape_cast %103 : vector<1x1x1x1x48xf32> to vector<1x1x1x48xf32>
    %105 = vector.broadcast %104 : vector<1x1x1x48xf32> to vector<2x4x4x48xf32>
    %106 = arith.mulf %82, %105 : vector<2x4x4x48xf32>
    %c3_167 = arith.constant 3 : index
    %c0_168 = arith.constant 0 : index
    %c0_169 = arith.constant 0 : index
    %c0_170 = arith.constant 0 : index
    %c0_171 = arith.constant 0 : index
    %107 = vector.load %arg4[%c3_167, %c0_168, %c0_169, %c0_170, %c0_171] : memref<9x1x1x1x48xf32, #tpu.memory_space<vmem>>, vector<1x1x1x1x48xf32>
    %108 = vector.shape_cast %107 : vector<1x1x1x1x48xf32> to vector<1x1x1x48xf32>
    %109 = vector.broadcast %108 : vector<1x1x1x48xf32> to vector<2x4x4x48xf32>
    %110 = arith.mulf %84, %109 : vector<2x4x4x48xf32>
    %c4_172 = arith.constant 4 : index
    %c0_173 = arith.constant 0 : index
    %c0_174 = arith.constant 0 : index
    %c0_175 = arith.constant 0 : index
    %c0_176 = arith.constant 0 : index
    %111 = vector.load %arg4[%c4_172, %c0_173, %c0_174, %c0_175, %c0_176] : memref<9x1x1x1x48xf32, #tpu.memory_space<vmem>>, vector<1x1x1x1x48xf32>
    %112 = vector.shape_cast %111 : vector<1x1x1x1x48xf32> to vector<1x1x1x48xf32>
    %113 = vector.broadcast %112 : vector<1x1x1x48xf32> to vector<2x4x4x48xf32>
    %114 = arith.mulf %86, %113 : vector<2x4x4x48xf32>
    %c5_177 = arith.constant 5 : index
    %c0_178 = arith.constant 0 : index
    %c0_179 = arith.constant 0 : index
    %c0_180 = arith.constant 0 : index
    %c0_181 = arith.constant 0 : index
    %115 = vector.load %arg4[%c5_177, %c0_178, %c0_179, %c0_180, %c0_181] : memref<9x1x1x1x48xf32, #tpu.memory_space<vmem>>, vector<1x1x1x1x48xf32>
    %116 = vector.shape_cast %115 : vector<1x1x1x1x48xf32> to vector<1x1x1x48xf32>
    %117 = vector.broadcast %116 : vector<1x1x1x48xf32> to vector<2x4x4x48xf32>
    %118 = arith.mulf %88, %117 : vector<2x4x4x48xf32>
    %c6 = arith.constant 6 : index
    %c0_182 = arith.constant 0 : index
    %c0_183 = arith.constant 0 : index
    %c0_184 = arith.constant 0 : index
    %c0_185 = arith.constant 0 : index
    %119 = vector.load %arg4[%c6, %c0_182, %c0_183, %c0_184, %c0_185] : memref<9x1x1x1x48xf32, #tpu.memory_space<vmem>>, vector<1x1x1x1x48xf32>
    %120 = vector.shape_cast %119 : vector<1x1x1x1x48xf32> to vector<1x1x1x48xf32>
    %121 = vector.broadcast %120 : vector<1x1x1x48xf32> to vector<2x4x4x48xf32>
    %122 = arith.mulf %90, %121 : vector<2x4x4x48xf32>
    %c7 = arith.constant 7 : index
    %c0_186 = arith.constant 0 : index
    %c0_187 = arith.constant 0 : index
    %c0_188 = arith.constant 0 : index
    %c0_189 = arith.constant 0 : index
    %123 = vector.load %arg4[%c7, %c0_186, %c0_187, %c0_188, %c0_189] : memref<9x1x1x1x48xf32, #tpu.memory_space<vmem>>, vector<1x1x1x1x48xf32>
    %124 = vector.shape_cast %123 : vector<1x1x1x1x48xf32> to vector<1x1x1x48xf32>
    %125 = vector.broadcast %124 : vector<1x1x1x48xf32> to vector<2x4x4x48xf32>
    %126 = arith.mulf %92, %125 : vector<2x4x4x48xf32>
    %c8_190 = arith.constant 8 : index
    %c0_191 = arith.constant 0 : index
    %c0_192 = arith.constant 0 : index
    %c0_193 = arith.constant 0 : index
    %c0_194 = arith.constant 0 : index
    %127 = vector.load %arg4[%c8_190, %c0_191, %c0_192, %c0_193, %c0_194] : memref<9x1x1x1x48xf32, #tpu.memory_space<vmem>>, vector<1x1x1x1x48xf32>
    %128 = vector.shape_cast %127 : vector<1x1x1x1x48xf32> to vector<1x1x1x48xf32>
    %129 = vector.broadcast %128 : vector<1x1x1x48xf32> to vector<2x4x4x48xf32>
    %130 = arith.mulf %94, %129 : vector<2x4x4x48xf32>
    %131 = arith.addf %98, %102 : vector<2x4x4x48xf32>
    %132 = arith.addf %106, %110 : vector<2x4x4x48xf32>
    %133 = arith.addf %114, %118 : vector<2x4x4x48xf32>
    %134 = arith.addf %122, %126 : vector<2x4x4x48xf32>
    %135 = arith.addf %131, %132 : vector<2x4x4x48xf32>
    %136 = arith.addf %133, %134 : vector<2x4x4x48xf32>
    %137 = arith.addf %135, %136 : vector<2x4x4x48xf32>
    %138 = arith.addf %137, %130 : vector<2x4x4x48xf32>
    %c0_195 = arith.constant 0 : index
    %c0_196 = arith.constant 0 : index
    %c0_197 = arith.constant 0 : index
    %c0_198 = arith.constant 0 : index
    %139 = vector.load %arg5[%c0_195, %c0_196, %c0_197, %c0_198] : memref<1x1x1x48xf32, #tpu.memory_space<vmem>>, vector<1x1x1x48xf32>
    %140 = vector.broadcast %139 : vector<1x1x1x48xf32> to vector<2x4x4x48xf32>
    %141 = arith.addf %138, %140 : vector<2x4x4x48xf32>
    %cst_199 = arith.constant 0.000000e+00 : f32
    %142 = vector.broadcast %cst_199 : f32 to vector<2x4x4x48xf32>
    %143 = arith.maximumf %141, %142 : vector<2x4x4x48xf32>
    %cst_200 = arith.constant 6.000000e+00 : f32
    %144 = vector.broadcast %cst_200 : f32 to vector<2x4x4x48xf32>
    %145 = arith.minimumf %143, %144 : vector<2x4x4x48xf32>
    %146 = arith.truncf %145 : vector<2x4x4x48xf32> to vector<2x4x4x48xbf16>
    %147 = vector.extract_strided_slice %146 {offsets = [0, 0, 0, 0], sizes = [1, 1, 4, 48], strides = [1, 1, 1, 1]} : vector<2x4x4x48xbf16> to vector<1x1x4x48xbf16>
    %148 = vector.shape_cast %147 : vector<1x1x4x48xbf16> to vector<4x48xbf16>
    %c0_201 = arith.constant 0 : index
    %c0_202 = arith.constant 0 : index
    %149 = vector.load %arg11[%c0_201, %c0_202] : memref<32x48xbf16, #tpu.memory_space<vmem>>, vector<4x48xbf16>
    tpu.vector_store %arg11[%c0_201, %c0_202], %148 {strides = array<i32>} : memref<32x48xbf16, #tpu.memory_space<vmem>>, vector<4x48xbf16>,
    %150 = vector.extract_strided_slice %146 {offsets = [0, 1, 0, 0], sizes = [1, 1, 4, 48], strides = [1, 1, 1, 1]} : vector<2x4x4x48xbf16> to vector<1x1x4x48xbf16>
    %151 = vector.shape_cast %150 : vector<1x1x4x48xbf16> to vector<4x48xbf16>
    %c4_203 = arith.constant 4 : index
    %c0_204 = arith.constant 0 : index
    %152 = vector.load %arg11[%c4_203, %c0_204] : memref<32x48xbf16, #tpu.memory_space<vmem>>, vector<4x48xbf16>
    tpu.vector_store %arg11[%c4_203, %c0_204], %151 {strides = array<i32>} : memref<32x48xbf16, #tpu.memory_space<vmem>>, vector<4x48xbf16>,
    %153 = vector.extract_strided_slice %146 {offsets = [0, 2, 0, 0], sizes = [1, 1, 4, 48], strides = [1, 1, 1, 1]} : vector<2x4x4x48xbf16> to vector<1x1x4x48xbf16>
    %154 = vector.shape_cast %153 : vector<1x1x4x48xbf16> to vector<4x48xbf16>
    %c8_205 = arith.constant 8 : index
    %c0_206 = arith.constant 0 : index
    %155 = vector.load %arg11[%c8_205, %c0_206] : memref<32x48xbf16, #tpu.memory_space<vmem>>, vector<4x48xbf16>
    tpu.vector_store %arg11[%c8_205, %c0_206], %154 {strides = array<i32>} : memref<32x48xbf16, #tpu.memory_space<vmem>>, vector<4x48xbf16>,
    %156 = vector.extract_strided_slice %146 {offsets = [0, 3, 0, 0], sizes = [1, 1, 4, 48], strides = [1, 1, 1, 1]} : vector<2x4x4x48xbf16> to vector<1x1x4x48xbf16>
    %157 = vector.shape_cast %156 : vector<1x1x4x48xbf16> to vector<4x48xbf16>
    %c12 = arith.constant 12 : index
    %c0_207 = arith.constant 0 : index
    %158 = vector.load %arg11[%c12, %c0_207] : memref<32x48xbf16, #tpu.memory_space<vmem>>, vector<4x48xbf16>
    tpu.vector_store %arg11[%c12, %c0_207], %157 {strides = array<i32>} : memref<32x48xbf16, #tpu.memory_space<vmem>>, vector<4x48xbf16>,
    %159 = vector.extract_strided_slice %146 {offsets = [1, 0, 0, 0], sizes = [1, 1, 4, 48], strides = [1, 1, 1, 1]} : vector<2x4x4x48xbf16> to vector<1x1x4x48xbf16>
    %160 = vector.shape_cast %159 : vector<1x1x4x48xbf16> to vector<4x48xbf16>
    %c16_208 = arith.constant 16 : index
    %c0_209 = arith.constant 0 : index
    %161 = vector.load %arg11[%c16_208, %c0_209] : memref<32x48xbf16, #tpu.memory_space<vmem>>, vector<4x48xbf16>
    tpu.vector_store %arg11[%c16_208, %c0_209], %160 {strides = array<i32>} : memref<32x48xbf16, #tpu.memory_space<vmem>>, vector<4x48xbf16>,
    %162 = vector.extract_strided_slice %146 {offsets = [1, 1, 0, 0], sizes = [1, 1, 4, 48], strides = [1, 1, 1, 1]} : vector<2x4x4x48xbf16> to vector<1x1x4x48xbf16>
    %163 = vector.shape_cast %162 : vector<1x1x4x48xbf16> to vector<4x48xbf16>
    %c20 = arith.constant 20 : index
    %c0_210 = arith.constant 0 : index
    %164 = vector.load %arg11[%c20, %c0_210] : memref<32x48xbf16, #tpu.memory_space<vmem>>, vector<4x48xbf16>
    tpu.vector_store %arg11[%c20, %c0_210], %163 {strides = array<i32>} : memref<32x48xbf16, #tpu.memory_space<vmem>>, vector<4x48xbf16>,
    %165 = vector.extract_strided_slice %146 {offsets = [1, 2, 0, 0], sizes = [1, 1, 4, 48], strides = [1, 1, 1, 1]} : vector<2x4x4x48xbf16> to vector<1x1x4x48xbf16>
    %166 = vector.shape_cast %165 : vector<1x1x4x48xbf16> to vector<4x48xbf16>
    %c24_211 = arith.constant 24 : index
    %c0_212 = arith.constant 0 : index
    %167 = vector.load %arg11[%c24_211, %c0_212] : memref<32x48xbf16, #tpu.memory_space<vmem>>, vector<4x48xbf16>
    tpu.vector_store %arg11[%c24_211, %c0_212], %166 {strides = array<i32>} : memref<32x48xbf16, #tpu.memory_space<vmem>>, vector<4x48xbf16>,
    %168 = vector.extract_strided_slice %146 {offsets = [1, 3, 0, 0], sizes = [1, 1, 4, 48], strides = [1, 1, 1, 1]} : vector<2x4x4x48xbf16> to vector<1x1x4x48xbf16>
    %169 = vector.shape_cast %168 : vector<1x1x4x48xbf16> to vector<4x48xbf16>
    %c28 = arith.constant 28 : index
    %c0_213 = arith.constant 0 : index
    %170 = vector.load %arg11[%c28, %c0_213] : memref<32x48xbf16, #tpu.memory_space<vmem>>, vector<4x48xbf16>
    tpu.vector_store %arg11[%c28, %c0_213], %169 {strides = array<i32>} : memref<32x48xbf16, #tpu.memory_space<vmem>>, vector<4x48xbf16>,
    %c0_214 = arith.constant 0 : index
    %c0_215 = arith.constant 0 : index
    %171 = vector.load %arg11[%c0_214, %c0_215] : memref<32x48xbf16, #tpu.memory_space<vmem>>, vector<32x48xbf16>
    %c0_216 = arith.constant 0 : index
    %c0_217 = arith.constant 0 : index
    %172 = vector.load %arg6[%c0_216, %c0_217] : memref<48x16xbf16, #tpu.memory_space<vmem>>, vector<48x16xbf16>
    %cst_218 = arith.constant dense<0.000000e+00> : vector<32x16xf32>
    %173 = tpu.matmul %171, %172, %cst_218 {dimension_numbers = #tpu.dot_dimension_numbers<[1], [0], [0], [1], [0, 0, 1, 1], [], []>} : vector<32x48xbf16>, vector<48x16xbf16>, vector<32x16xf32> -> vector<32x16xf32>
    %c0_219 = arith.constant 0 : index
    %c0_220 = arith.constant 0 : index
    %174 = vector.load %arg7[%c0_219, %c0_220] : memref<1x16xf32, #tpu.memory_space<vmem>>, vector<1x16xf32>
    %175 = vector.broadcast %174 : vector<1x16xf32> to vector<32x16xf32>
    %176 = arith.addf %173, %175 : vector<32x16xf32>
    %177 = arith.truncf %176 : vector<32x16xf32> to vector<32x16xbf16>
    %c0_221 = arith.constant 0 : index
    %c0_222 = arith.constant 0 : index
    %178 = vector.load %arg8[%c0_221, %c0_222] : memref<32x16xbf16, #tpu.memory_space<vmem>>, vector<32x16xbf16>
    tpu.vector_store %arg8[%c0_221, %c0_222], %177 {strides = array<i32>} : memref<32x16xbf16, #tpu.memory_space<vmem>>, vector<32x16xbf16>,
    return
  }
  func.func @transform_0(%arg0: i32) -> (i32, i32) {
    %c0_i32 = arith.constant 0 : i32
    %c0_i32_0 = arith.constant 0 : i32
    %c0_i32_1 = arith.constant 0 : i32
    return %c0_i32, %c0_i32_0 : i32, i32
  }
  func.func @transform_1(%arg0: i32) -> (i32, i32) {
    %c0_i32 = arith.constant 0 : i32
    %c0_i32_0 = arith.constant 0 : i32
    %c0_i32_1 = arith.constant 0 : i32
    return %c0_i32, %c0_i32_0 : i32, i32
  }
  func.func @transform_2(%arg0: i32) -> (i32, i32) {
    %c0_i32 = arith.constant 0 : i32
    %c0_i32_0 = arith.constant 0 : i32
    %c0_i32_1 = arith.constant 0 : i32
    return %c0_i32, %c0_i32_0 : i32, i32
  }
  func.func @transform_3(%arg0: i32) -> (i32, i32, i32, i32, i32) {
    %c0_i32 = arith.constant 0 : i32
    %c0_i32_0 = arith.constant 0 : i32
    %c0_i32_1 = arith.constant 0 : i32
    %c0_i32_2 = arith.constant 0 : i32
    %c0_i32_3 = arith.constant 0 : i32
    %c0_i32_4 = arith.constant 0 : i32
    return %c0_i32, %c0_i32_0, %c0_i32_1, %c0_i32_2, %c0_i32_3 : i32, i32, i32, i32, i32
  }
  func.func @transform_4(%arg0: i32) -> (i32, i32, i32, i32) {
    %c0_i32 = arith.constant 0 : i32
    %c0_i32_0 = arith.constant 0 : i32
    %c0_i32_1 = arith.constant 0 : i32
    %c0_i32_2 = arith.constant 0 : i32
    %c0_i32_3 = arith.constant 0 : i32
    return %c0_i32, %c0_i32_0, %c0_i32_1, %c0_i32_2 : i32, i32, i32, i32
  }
  func.func @transform_5(%arg0: i32) -> (i32, i32) {
    %c0_i32 = arith.constant 0 : i32
    %c0_i32_0 = arith.constant 0 : i32
    %c0_i32_1 = arith.constant 0 : i32
    return %c0_i32, %c0_i32_0 : i32, i32
  }
  func.func @transform_6(%arg0: i32) -> (i32, i32) {
    %c0_i32 = arith.constant 0 : i32
    %c0_i32_0 = arith.constant 0 : i32
    %c0_i32_1 = arith.constant 0 : i32
    return %c0_i32, %c0_i32_0 : i32, i32
  }
  func.func @transform_7(%arg0: i32) -> (i32, i32) {
    %c0_i32 = arith.constant 0 : i32
    %c0_i32_0 = arith.constant 0 : i32
    %c0_i32_1 = arith.constant 0 : i32
    return %c0_i32, %c0_i32_0 : i32, i32
  }
}

</mosaic_0001>

<llo_original>
// kernel: tpu_custom_call.1
$region0: #{tpu_custom_call.1}
  #allocation0 [shape = 'u32[]', space=smem, size = 0x4, offset = 0x4, fixed_abs, tag = 'smem constant byte address 0x4 - core index']
  #allocation1 [shape = 'u32[144,128]{1,0:T(1,128)}', space=vmem, size = 0x12000, scoped, tag = 'internal scratch']
  #allocation2 [shape = 'f32[128,48]{1,0:T(8,128)}', space=vmem, size = 0x10000, scoped, tag = 'scratch operand']
  #allocation3 [shape = 'f32[2,2,5,9,48]{4,3,2,1,0:T(8,128)}', space=vmem, size = 0x28000, scoped, tag = 'scratch operand']
  #allocation4 [shape = 'bf16[32,48]{1,0:T(16,128)(2,1)}', space=vmem, size = 0x2000, scoped, tag = 'scratch operand']
  %s0 = inlined_call_operand.vmem [shape: bf16[128,8], index: 0, kind: input, shape index: {}]
  %s1 = inlined_call_operand.vmem [shape: bf16[8,48], index: 1, kind: input, shape index: {}]
  %s2 = inlined_call_operand.vmem [shape: f32[1,48], index: 2, kind: input, shape index: {}]
  %s3 = inlined_call_operand.vmem [shape: f32[9,1,1,1,48], index: 3, kind: input, shape index: {}]
  %s4 = inlined_call_operand.vmem [shape: f32[1,1,1,48], index: 4, kind: input, shape index: {}]
  %s5 = inlined_call_operand.vmem [shape: bf16[48,16], index: 5, kind: input, shape index: {}]
  %s6 = inlined_call_operand.vmem [shape: f32[1,16], index: 6, kind: input, shape index: {}]
  %s7 = inlined_call_operand.vmem [shape: bf16[32,16], index: 7, kind: output, shape index: {}]
  %s8 = sld [smem:[#allocation0]]
  $region38: #{tpu_custom_call.1} parent=0
    _
  %s10 = ssub.s32 1, %s8
  %s11 = scalar_select 0, %s10, %s8
  // Predicated region
  $region2: #{tpu_custom_call.1} parent=0 // pred_check
    _
  $region3: #{tpu_custom_call.1} parent=0 // pred_check_branch
    %13 = sbr.rel (0) target = $region5
  $region4: #{tpu_custom_call.1} parent=0 // pred_region
    _
  $region5: #{tpu_custom_call.1} parent=0 // pred_fallthru
    _
  // Predicated region
  $region6: #{tpu_custom_call.1} parent=0 // pred_check
    _
  $region7: #{tpu_custom_call.1} parent=0 // pred_check_branch
    %15 = sbr.rel (0) target = $region9
  $region8: #{tpu_custom_call.1} parent=0 // pred_region
    _
  $region9: #{tpu_custom_call.1} parent=0 // pred_fallthru
    _
  // Predicated region
  $region10: #{tpu_custom_call.1} parent=0 // pred_check
    _
  $region11: #{tpu_custom_call.1} parent=0 // pred_check_branch
    %17 = sbr.rel (0) target = $region13
  $region12: #{tpu_custom_call.1} parent=0 // pred_region
    _
  $region13: #{tpu_custom_call.1} parent=0 // pred_fallthru
    _
  // Predicated region
  $region14: #{tpu_custom_call.1} parent=0 // pred_check
    _
  $region15: #{tpu_custom_call.1} parent=0 // pred_check_branch
    %19 = sbr.rel (0) target = $region17
  $region16: #{tpu_custom_call.1} parent=0 // pred_region
    _
  $region17: #{tpu_custom_call.1} parent=0 // pred_fallthru
    _
  // Predicated region
  $region18: #{tpu_custom_call.1} parent=0 // pred_check
    _
  $region19: #{tpu_custom_call.1} parent=0 // pred_check_branch
    %21 = sbr.rel (0) target = $region21
  $region20: #{tpu_custom_call.1} parent=0 // pred_region
    _
  $region21: #{tpu_custom_call.1} parent=0 // pred_fallthru
    _
  // Predicated region
  $region22: #{tpu_custom_call.1} parent=0 // pred_check
    _
  $region23: #{tpu_custom_call.1} parent=0 // pred_check_branch
    %23 = sbr.rel (0) target = $region25
  $region24: #{tpu_custom_call.1} parent=0 // pred_region
    _
  $region25: #{tpu_custom_call.1} parent=0 // pred_fallthru
    _
  // Predicated region
  $region26: #{tpu_custom_call.1} parent=0 // pred_check
    _
  $region27: #{tpu_custom_call.1} parent=0 // pred_check_branch
    %25 = sbr.rel (0) target = $region29
  $region28: #{tpu_custom_call.1} parent=0 // pred_region
    _
  $region29: #{tpu_custom_call.1} parent=0 // pred_fallthru
    _
  %v27 = vld [vmem:[%s0] sm:$0xf]
  %v28 = vld [vmem:[%s0 + $0x4] sm:$0xf]
  %v29 = vld [vmem:[%s0 + $0x8] sm:$0xf]
  %v30 = vld [vmem:[%s0 + $0xc] sm:$0xf]
  %v31 = vld [vmem:[%s0 + $0x10] sm:$0xf]
  %v32 = vld [vmem:[%s0 + $0x14] sm:$0xf]
  %v33 = vld [vmem:[%s0 + $0x18] sm:$0xf]
  %v34 = vld [vmem:[%s0 + $0x1c] sm:$0xf]
  %v35 = vld [vmem:[%s0 + $0x20] sm:$0xf]
  %v36 = vld [vmem:[%s0 + $0x24] sm:$0xf]
  %v37 = vld [vmem:[%s0 + $0x28] sm:$0xf]
  %v38 = vld [vmem:[%s0 + $0x2c] sm:$0xf]
  %v39 = vld [vmem:[%s0 + $0x30] sm:$0xf]
  %v40 = vld [vmem:[%s0 + $0x34] sm:$0xf]
  %v41 = vld [vmem:[%s0 + $0x38] sm:$0xf]
  %v42 = vld [vmem:[%s0 + $0x3c] sm:$0xf]
  %v43 = vld [vmem:[%s1] sm:$0xf]
  %v44 = vld [vmem:[%s2] sm:$0x1]
  %v46 = vlaneseq
  %v47 = vshrl.u32 %v46, 7
  %v48 = vsub.s32 0, %v47
  %v49 = vrot.slane %v44, %v48
  %v67 = vunpack.c.l.b16 %v27
  %v68 = vunpack.c.l.b16 %v28
  %v69 = vunpack.c.l.b16 %v29
  %v70 = vunpack.c.l.b16 %v30
  %v71 = vunpack.c.l.b16 %v31
  %v72 = vunpack.c.l.b16 %v32
  %v73 = vunpack.c.l.b16 %v33
  %v74 = vunpack.c.l.b16 %v34
  %v75 = vunpack.c.l.b16 %v35
  %v76 = vunpack.c.l.b16 %v36
  %v77 = vunpack.c.l.b16 %v37
  %v78 = vunpack.c.l.b16 %v38
  %v79 = vunpack.c.l.b16 %v39
  %v80 = vunpack.c.l.b16 %v40
  %v81 = vunpack.c.l.b16 %v41
  %v82 = vunpack.c.l.b16 %v42
  %v83 = vpack.c.b16 %v68, %v67
  %v84 = vpack.c.b16 %v70, %v69
  %v85 = vpack.c.b16 %v72, %v71
  %v86 = vpack.c.b16 %v74, %v73
  %v87 = vpack.c.b16 %v76, %v75
  %v88 = vpack.c.b16 %v78, %v77
  %v89 = vpack.c.b16 %v80, %v79
  %v90 = vpack.c.b16 %v82, %v81
  %vm91 = vcmask 64512
  %v93 = vsel %vm91, %v83, 0
  %v96 = vsel %vm91, %v84, 0
  %v99 = vsel %vm91, %v85, 0
  %v102 = vsel %vm91, %v86, 0
  %v105 = vsel %vm91, %v87, 0
  %v108 = vsel %vm91, %v88, 0
  %v111 = vsel %vm91, %v89, 0
  %v114 = vsel %vm91, %v90, 0
  %vm116 = vcmask 1043456
  %v118 = vsel %vm116, %v43, 0
  %120 = vmatprep.subr.bf16.mxu0 0
  %121 = vmatpush1.bf16.msra.mxu0 %v118
  %122 = vmatprep.subr.bf16.mxu0 0
  %123 = vmatpush1.bf16.msra.mxu0 0
  %124 = vmatprep.subr.bf16.mxu0 0
  %125 = vmatpush1.bf16.msra.mxu0 0
  %126 = vmatprep.subr.bf16.mxu0 0
  %127 = vmatpush1.bf16.msra.mxu0 0
  %128 = vmatprep.subr.bf16.mxu0 0
  %129 = vmatpush1.bf16.msra.mxu0 0
  %130 = vmatprep.subr.bf16.mxu0 0
  %131 = vmatpush1.bf16.msra.mxu0 0
  %132 = vmatprep.subr.bf16.mxu0 0
  %133 = vmatpush1.bf16.msra.mxu0 0
  %134 = vmatprep.subr.bf16.mxu0 0
  %135 = vmatpush1.bf16.msra.mxu0 0
  %136 = vmatprep.subr.bf16.mxu0 0
  %137 = vmatpush1.bf16.msra.mxu0 0
  %138 = vmatprep.subr.bf16.mxu0 0
  %139 = vmatpush1.bf16.msra.mxu0 0
  %140 = vmatprep.subr.bf16.mxu0 0
  %141 = vmatpush1.bf16.msra.mxu0 0
  %142 = vmatprep.subr.bf16.mxu0 0
  %143 = vmatpush1.bf16.msra.mxu0 0
  %144 = vmatprep.subr.bf16.mxu0 0
  %145 = vmatpush1.bf16.msra.mxu0 0
  %146 = vmatprep.subr.bf16.mxu0 0
  %147 = vmatpush1.bf16.msra.mxu0 0
  %148 = vmatprep.subr.bf16.mxu0 0
  %149 = vmatpush1.bf16.msra.mxu0 0
  %150 = vmatprep.subr.bf16.mxu0 0
  %151 = vmatpush1.bf16.msra.mxu0 0
  %152 = vmatprep.mubr.bf16.mxu0 0
  %153 = vmatmul.mubr.bf16.gmra.mrb[0].mxu0 %v93
  %v154 = vpop.f32.mrb[0].mxu0
  %v155 = vadd.f32 %v49, %v154
  %v156 = vpop.f32.mrb[0].mxu0
  %v157 = vpop.f32.mrb[0].mxu0
  %v158 = vadd.f32 %v49, %v157
  %v159 = vpop.f32.mrb[0].mxu0
  %160 = vmatprep.mubr.bf16.mxu0 0
  %161 = vmatmul.mubr.bf16.gmra.mrb[0].mxu0 %v96
  %v162 = vpop.f32.mrb[0].mxu0
  %v163 = vadd.f32 %v49, %v162
  %v164 = vpop.f32.mrb[0].mxu0
  %v165 = vpop.f32.mrb[0].mxu0
  %v166 = vadd.f32 %v49, %v165
  %v167 = vpop.f32.mrb[0].mxu0
  %168 = vmatprep.mubr.bf16.mxu0 0
  %169 = vmatmul.mubr.bf16.gmra.mrb[0].mxu0 %v99
  %v170 = vpop.f32.mrb[0].mxu0
  %v171 = vadd.f32 %v49, %v170
  %v172 = vpop.f32.mrb[0].mxu0
  %v173 = vpop.f32.mrb[0].mxu0
  %v174 = vadd.f32 %v49, %v173
  %v175 = vpop.f32.mrb[0].mxu0
  %176 = vmatprep.mubr.bf16.mxu0 0
  %177 = vmatmul.mubr.bf16.gmra.mrb[0].mxu0 %v102
  %v178 = vpop.f32.mrb[0].mxu0
  %v179 = vadd.f32 %v49, %v178
  %v180 = vpop.f32.mrb[0].mxu0
  %v181 = vpop.f32.mrb[0].mxu0
  %v182 = vadd.f32 %v49, %v181
  %v183 = vpop.f32.mrb[0].mxu0
  %184 = vmatprep.mubr.bf16.mxu0 0
  %185 = vmatmul.mubr.bf16.gmra.mrb[0].mxu0 %v105
  %v186 = vpop.f32.mrb[0].mxu0
  %v187 = vadd.f32 %v49, %v186
  %v188 = vpop.f32.mrb[0].mxu0
  %v189 = vpop.f32.mrb[0].mxu0
  %v190 = vadd.f32 %v49, %v189
  %v191 = vpop.f32.mrb[0].mxu0
  %192 = vmatprep.mubr.bf16.mxu0 0
  %193 = vmatmul.mubr.bf16.gmra.mrb[0].mxu0 %v108
  %v194 = vpop.f32.mrb[0].mxu0
  %v195 = vadd.f32 %v49, %v194
  %v196 = vpop.f32.mrb[0].mxu0
  %v197 = vpop.f32.mrb[0].mxu0
  %v198 = vadd.f32 %v49, %v197
  %v199 = vpop.f32.mrb[0].mxu0
  %200 = vmatprep.mubr.bf16.mxu0 0
  %201 = vmatmul.mubr.bf16.gmra.mrb[0].mxu0 %v111
  %v202 = vpop.f32.mrb[0].mxu0
  %v203 = vadd.f32 %v49, %v202
  %v204 = vpop.f32.mrb[0].mxu0
  %v205 = vpop.f32.mrb[0].mxu0
  %v206 = vadd.f32 %v49, %v205
  %v207 = vpop.f32.mrb[0].mxu0
  %208 = vmatprep.mubr.bf16.mxu0 0
  %209 = vmatmul.mubr.bf16.gmra.mrb[0].mxu0 %v114
  %v210 = vpop.f32.mrb[0].mxu0
  %v211 = vadd.f32 %v49, %v210
  %v212 = vpop.f32.mrb[0].mxu0
  %v213 = vpop.f32.mrb[0].mxu0
  %v214 = vadd.f32 %v49, %v213
  %v215 = vpop.f32.mrb[0].mxu0
  %216 = vdwg.mxu0
  %v217 = vmax.f32 %v155, 0.0
  %v218 = vmax.f32 %v158, 0.0
  %v219 = vmax.f32 %v163, 0.0
  %v220 = vmax.f32 %v166, 0.0
  %v221 = vmax.f32 %v171, 0.0
  %v222 = vmax.f32 %v174, 0.0
  %v223 = vmax.f32 %v179, 0.0
  %v224 = vmax.f32 %v182, 0.0
  %v225 = vmax.f32 %v187, 0.0
  %v226 = vmax.f32 %v190, 0.0
  %v227 = vmax.f32 %v195, 0.0
  %v228 = vmax.f32 %v198, 0.0
  %v229 = vmax.f32 %v203, 0.0
  %v230 = vmax.f32 %v206, 0.0
  %v231 = vmax.f32 %v211, 0.0
  %v232 = vmax.f32 %v214, 0.0
  %v233 = vmin.f32 %v217, 6.0
  %v234 = vmin.f32 %v218, 6.0
  %v235 = vmin.f32 %v219, 6.0
  %v236 = vmin.f32 %v220, 6.0
  %v237 = vmin.f32 %v221, 6.0
  %v238 = vmin.f32 %v222, 6.0
  %v239 = vmin.f32 %v223, 6.0
  %v240 = vmin.f32 %v224, 6.0
  %v241 = vmin.f32 %v225, 6.0
  %v242 = vmin.f32 %v226, 6.0
  %v243 = vmin.f32 %v227, 6.0
  %v244 = vmin.f32 %v228, 6.0
  %v245 = vmin.f32 %v229, 6.0
  %v246 = vmin.f32 %v230, 6.0
  %v247 = vmin.f32 %v231, 6.0
  %v248 = vmin.f32 %v232, 6.0
  %vm249 = vcmask 392192
  %250 = vst.msk [vmem:[#allocation2] sm:$0xff] %vm249, %v233
  %251 = vst.msk [vmem:[#allocation2 + $0x8] sm:$0xff] %vm249, %v234
  %252 = vst.msk [vmem:[#allocation2 + $0x10] sm:$0xff] %vm249, %v235
  %253 = vst.msk [vmem:[#allocation2 + $0x18] sm:$0xff] %vm249, %v236
  %254 = vst.msk [vmem:[#allocation2 + $0x20] sm:$0xff] %vm249, %v237
  %255 = vst.msk [vmem:[#allocation2 + $0x28] sm:$0xff] %vm249, %v238
  %256 = vst.msk [vmem:[#allocation2 + $0x30] sm:$0xff] %vm249, %v239
  %257 = vst.msk [vmem:[#allocation2 + $0x38] sm:$0xff] %vm249, %v240
  %258 = vst.msk [vmem:[#allocation2 + $0x40] sm:$0xff] %vm249, %v241
  %259 = vst.msk [vmem:[#allocation2 + $0x48] sm:$0xff] %vm249, %v242
  %260 = vst.msk [vmem:[#allocation2 + $0x50] sm:$0xff] %vm249, %v243
  %261 = vst.msk [vmem:[#allocation2 + $0x58] sm:$0xff] %vm249, %v244
  %262 = vst.msk [vmem:[#allocation2 + $0x60] sm:$0xff] %vm249, %v245
  %263 = vst.msk [vmem:[#allocation2 + $0x68] sm:$0xff] %vm249, %v246
  %264 = vst.msk [vmem:[#allocation2 + $0x70] sm:$0xff] %vm249, %v247
  %265 = vst.msk [vmem:[#allocation2 + $0x78] sm:$0xff] %vm249, %v248
  %266 = vst.msk [vmem:[#allocation3] sm:$0xff] %vm249, 0.0
  %vm267 = vcmask 385024
  %268 = vst.msk [vmem:[#allocation3 + $0x8] sm:$0x1] %vm267, 0.0
  %269 = vst.msk [vmem:[#allocation3 + $0x10] sm:$0xff] %vm249, 0.0
  %270 = vst.msk [vmem:[#allocation3 + $0x18] sm:$0x1] %vm267, 0.0
  %271 = vst.msk [vmem:[#allocation3 + $0x20] sm:$0xff] %vm249, 0.0
  %272 = vst.msk [vmem:[#allocation3 + $0x28] sm:$0x1] %vm267, 0.0
  %273 = vst.msk [vmem:[#allocation3 + $0x30] sm:$0xff] %vm249, 0.0
  %274 = vst.msk [vmem:[#allocation3 + $0x38] sm:$0x1] %vm267, 0.0
  %275 = vst.msk [vmem:[#allocation3 + $0x40] sm:$0xff] %vm249, 0.0
  %276 = vst.msk [vmem:[#allocation3 + $0x48] sm:$0x1] %vm267, 0.0
  %277 = vst.msk [vmem:[#allocation3 + $0x50] sm:$0xff] %vm249, 0.0
  %278 = vst.msk [vmem:[#allocation3 + $0x58] sm:$0x1] %vm267, 0.0
  %279 = vst.msk [vmem:[#allocation3 + $0x60] sm:$0xff] %vm249, 0.0
  %280 = vst.msk [vmem:[#allocation3 + $0x68] sm:$0x1] %vm267, 0.0
  %281 = vst.msk [vmem:[#allocation3 + $0x70] sm:$0xff] %vm249, 0.0
  %282 = vst.msk [vmem:[#allocation3 + $0x78] sm:$0x1] %vm267, 0.0
  %283 = vst.msk [vmem:[#allocation3 + $0x80] sm:$0xff] %vm249, 0.0
  %284 = vst.msk [vmem:[#allocation3 + $0x88] sm:$0x1] %vm267, 0.0
  %285 = vst.msk [vmem:[#allocation3 + $0x90] sm:$0xff] %vm249, 0.0
  %286 = vst.msk [vmem:[#allocation3 + $0x98] sm:$0x1] %vm267, 0.0
  %287 = vst.msk [vmem:[#allocation3 + $0xa0] sm:$0xff] %vm249, 0.0
  %288 = vst.msk [vmem:[#allocation3 + $0xa8] sm:$0x1] %vm267, 0.0
  %289 = vst.msk [vmem:[#allocation3 + $0xb0] sm:$0xff] %vm249, 0.0
  %290 = vst.msk [vmem:[#allocation3 + $0xb8] sm:$0x1] %vm267, 0.0
  %291 = vst.msk [vmem:[#allocation3 + $0xc0] sm:$0xff] %vm249, 0.0
  %292 = vst.msk [vmem:[#allocation3 + $0xc8] sm:$0x1] %vm267, 0.0
  %293 = vst.msk [vmem:[#allocation3 + $0xd0] sm:$0xff] %vm249, 0.0
  %294 = vst.msk [vmem:[#allocation3 + $0xd8] sm:$0x1] %vm267, 0.0
  %295 = vst.msk [vmem:[#allocation3 + $0xe0] sm:$0xff] %vm249, 0.0
  %296 = vst.msk [vmem:[#allocation3 + $0xe8] sm:$0x1] %vm267, 0.0
  %297 = vst.msk [vmem:[#allocation3 + $0xf0] sm:$0xff] %vm249, 0.0
  %298 = vst.msk [vmem:[#allocation3 + $0xf8] sm:$0x1] %vm267, 0.0
  %299 = vst.msk [vmem:[#allocation3 + $0x100] sm:$0xff] %vm249, 0.0
  %300 = vst.msk [vmem:[#allocation3 + $0x108] sm:$0x1] %vm267, 0.0
  %301 = vst.msk [vmem:[#allocation3 + $0x110] sm:$0xff] %vm249, 0.0
  %302 = vst.msk [vmem:[#allocation3 + $0x118] sm:$0x1] %vm267, 0.0
  %303 = vst.msk [vmem:[#allocation3 + $0x120] sm:$0xff] %vm249, 0.0
  %304 = vst.msk [vmem:[#allocation3 + $0x128] sm:$0x1] %vm267, 0.0
  %305 = vst.msk [vmem:[#allocation3 + $0x130] sm:$0xff] %vm249, 0.0
  %306 = vst.msk [vmem:[#allocation3 + $0x138] sm:$0x1] %vm267, 0.0
  %v307 = vld [vmem:[#allocation2] sm:$0xff]
  %s308 = scalar_lea.vmem [#allocation3], 160
  %309 = vst.msk [vmem:[%s308 + $0x1] sm:$0xff] %vm249, %v307
  %v310 = vld [vmem:[#allocation2 + $0x8] sm:$0xff]
  %s311 = scalar_lea.vmem [#allocation3], 16
  %312 = vst.msk [vmem:[%s311 + $0x1] sm:$0xff] %vm249, %v310
  %v313 = vld [vmem:[#allocation2 + $0x10] sm:$0xff]
  %s314 = scalar_lea.vmem [#allocation3], 176
  %315 = vst.msk [vmem:[%s314 + $0x1] sm:$0xff] %vm249, %v313
  %v316 = vld [vmem:[#allocation2 + $0x18] sm:$0xff]
  %s317 = scalar_lea.vmem [#allocation3], 32
  %318 = vst.msk [vmem:[%s317 + $0x1] sm:$0xff] %vm249, %v316
  %v319 = vld [vmem:[#allocation2 + $0x20] sm:$0xff]
  %s320 = scalar_lea.vmem [#allocation3], 192
  %321 = vst.msk [vmem:[%s320 + $0x1] sm:$0xff] %vm249, %v319
  %v322 = vld [vmem:[#allocation2 + $0x28] sm:$0xff]
  %s323 = scalar_lea.vmem [#allocation3], 48
  %324 = vst.msk [vmem:[%s323 + $0x1] sm:$0xff] %vm249, %v322
  %v325 = vld [vmem:[#allocation2 + $0x30] sm:$0xff]
  %s326 = scalar_lea.vmem [#allocation3], 208
  %327 = vst.msk [vmem:[%s326 + $0x1] sm:$0xff] %vm249, %v325
  %v328 = vld [vmem:[#allocation2 + $0x38] sm:$0xff]
  %s329 = scalar_lea.vmem [#allocation3], 64
  %330 = vst.msk [vmem:[%s329 + $0x1] sm:$0xff] %vm249, %v328
  %v331 = vld [vmem:[#allocation2 + $0x40] sm:$0xff]
  %s332 = scalar_lea.vmem [#allocation3], 240
  %333 = vst.msk [vmem:[%s332 + $0x1] sm:$0xff] %vm249, %v331
  %v334 = vld [vmem:[#allocation2 + $0x48] sm:$0xff]
  %s335 = scalar_lea.vmem [#allocation3], 96
  %336 = vst.msk [vmem:[%s335 + $0x1] sm:$0xff] %vm249, %v334
  %v337 = vld [vmem:[#allocation2 + $0x50] sm:$0xff]
  %s338 = scalar_lea.vmem [#allocation3], 256
  %339 = vst.msk [vmem:[%s338 + $0x1] sm:$0xff] %vm249, %v337
  %v340 = vld [vmem:[#allocation2 + $0x58] sm:$0xff]
  %s341 = scalar_lea.vmem [#allocation3], 112
  %342 = vst.msk [vmem:[%s341 + $0x1] sm:$0xff] %vm249, %v340
  %v343 = vld [vmem:[#allocation2 + $0x60] sm:$0xff]
  %s344 = scalar_lea.vmem [#allocation3], 272
  %345 = vst.msk [vmem:[%s344 + $0x1] sm:$0xff] %vm249, %v343
  %v346 = vld [vmem:[#allocation2 + $0x68] sm:$0xff]
  %s347 = scalar_lea.vmem [#allocation3], 128
  %348 = vst.msk [vmem:[%s347 + $0x1] sm:$0xff] %vm249, %v346
  %v349 = vld [vmem:[#allocation2 + $0x70] sm:$0xff]
  %s350 = scalar_lea.vmem [#allocation3], 288
  %351 = vst.msk [vmem:[%s350 + $0x1] sm:$0xff] %vm249, %v349
  %v352 = vld [vmem:[#allocation2 + $0x78] sm:$0xff]
  %s353 = scalar_lea.vmem [#allocation3], 144
  %354 = vst.msk [vmem:[%s353 + $0x1] sm:$0xff] %vm249, %v352
  %v355 = vld [vmem:[#allocation3] sm:$0xf]
  %v356 = vld [vmem:[#allocation3 + $0x10] sm:$0xf]
  %v357 = vld [vmem:[#allocation3 + $0x20] sm:$0xf]
  %v358 = vld [vmem:[#allocation3 + $0x30] sm:$0xf]
  %v359 = vld [vmem:[#allocation3 + $0x50] sm:$0xf]
  %v360 = vld [vmem:[#allocation3 + $0x60] sm:$0xf]
  %v361 = vld [vmem:[#allocation3 + $0x70] sm:$0xf]
  %v362 = vld [vmem:[#allocation3 + $0x80] sm:$0xf]
  %v363 = vld [vmem:[#allocation3 + $0x5] sm:$0xf]
  %v364 = vld [vmem:[#allocation3 + $0x15] sm:$0xf]
  %v365 = vld [vmem:[#allocation3 + $0x25] sm:$0xf]
  %v366 = vld [vmem:[#allocation3 + $0x35] sm:$0xf]
  %v367 = vld [vmem:[#allocation3 + $0x55] sm:$0xf]
  %v368 = vld [vmem:[#allocation3 + $0x65] sm:$0xf]
  %v369 = vld [vmem:[#allocation3 + $0x75] sm:$0xf]
  %v370 = vld [vmem:[#allocation3 + $0x85] sm:$0xf]
  %v371 = vld [vmem:[#allocation3 + $0x1] sm:$0xf]
  %v372 = vld [vmem:[#allocation3 + $0x11] sm:$0xf]
  %v373 = vld [vmem:[#allocation3 + $0x21] sm:$0xf]
  %v374 = vld [vmem:[#allocation3 + $0x31] sm:$0xf]
  %v375 = vld [vmem:[#allocation3 + $0x51] sm:$0xf]
  %v376 = vld [vmem:[#allocation3 + $0x61] sm:$0xf]
  %v377 = vld [vmem:[#allocation3 + $0x71] sm:$0xf]
  %v378 = vld [vmem:[#allocation3 + $0x81] sm:$0xf]
  %v379 = vld [vmem:[%s308] sm:$0xf]
  %v380 = vld [vmem:[%s308 + $0x10] sm:$0xf]
  %v381 = vld [vmem:[%s308 + $0x20] sm:$0xf]
  %v382 = vld [vmem:[%s308 + $0x30] sm:$0xf]
  %v383 = vld [vmem:[%s308 + $0x50] sm:$0xf]
  %v384 = vld [vmem:[%s308 + $0x60] sm:$0xf]
  %v385 = vld [vmem:[%s308 + $0x70] sm:$0xf]
  %v386 = vld [vmem:[%s308 + $0x80] sm:$0xf]
  %v387 = vld [vmem:[%s308 + $0x5] sm:$0xf]
  %v388 = vld [vmem:[%s308 + $0x15] sm:$0xf]
  %v389 = vld [vmem:[%s308 + $0x25] sm:$0xf]
  %v390 = vld [vmem:[%s308 + $0x35] sm:$0xf]
  %v391 = vld [vmem:[%s308 + $0x55] sm:$0xf]
  %v392 = vld [vmem:[%s308 + $0x65] sm:$0xf]
  %v393 = vld [vmem:[%s308 + $0x75] sm:$0xf]
  %v394 = vld [vmem:[%s308 + $0x85] sm:$0xf]
  %v395 = vld [vmem:[%s308 + $0x1] sm:$0xf]
  %v396 = vld [vmem:[%s308 + $0x11] sm:$0xf]
  %v397 = vld [vmem:[%s308 + $0x21] sm:$0xf]
  %v398 = vld [vmem:[%s308 + $0x31] sm:$0xf]
  %v399 = vld [vmem:[%s308 + $0x51] sm:$0xf]
  %v400 = vld [vmem:[%s308 + $0x61] sm:$0xf]
  %v401 = vld [vmem:[%s308 + $0x71] sm:$0xf]
  %v402 = vld [vmem:[%s308 + $0x81] sm:$0xf]
  %v403 = vld [vmem:[%s311] sm:$0xf]
  %v404 = vld [vmem:[%s311 + $0x10] sm:$0xf]
  %v405 = vld [vmem:[%s311 + $0x20] sm:$0xf]
  %v406 = vld [vmem:[%s311 + $0x30] sm:$0xf]
  %v407 = vld [vmem:[%s311 + $0x50] sm:$0xf]
  %v408 = vld [vmem:[%s311 + $0x60] sm:$0xf]
  %v409 = vld [vmem:[%s311 + $0x70] sm:$0xf]
  %v410 = vld [vmem:[%s311 + $0x80] sm:$0xf]
  %v411 = vld [vmem:[%s311 + $0x5] sm:$0xf]
  %v412 = vld [vmem:[%s311 + $0x15] sm:$0xf]
  %v413 = vld [vmem:[%s311 + $0x25] sm:$0xf]
  %v414 = vld [vmem:[%s311 + $0x35] sm:$0xf]
  %v415 = vld [vmem:[%s311 + $0x55] sm:$0xf]
  %v416 = vld [vmem:[%s311 + $0x65] sm:$0xf]
  %v417 = vld [vmem:[%s311 + $0x75] sm:$0xf]
  %v418 = vld [vmem:[%s311 + $0x85] sm:$0xf]
  %v419 = vld [vmem:[%s311 + $0x1] sm:$0xf]
  %v420 = vld [vmem:[%s311 + $0x11] sm:$0xf]
  %v421 = vld [vmem:[%s311 + $0x21] sm:$0xf]
  %v422 = vld [vmem:[%s311 + $0x31] sm:$0xf]
  %v423 = vld [vmem:[%s311 + $0x51] sm:$0xf]
  %v424 = vld [vmem:[%s311 + $0x61] sm:$0xf]
  %v425 = vld [vmem:[%s311 + $0x71] sm:$0xf]
  %v426 = vld [vmem:[%s311 + $0x81] sm:$0xf]
  %v427 = vld [vmem:[%s3] sm:$0x1]
  %v429 = vlaneseq
  %v430 = vshrl.u32 %v429, 7
  %v431 = vsub.s32 0, %v430
  %v432 = vrot.slane %v427, %v431
  %v434 = vmul.f32 %v355, %v432
  %v435 = vmul.f32 %v356, %v432
  %v436 = vmul.f32 %v357, %v432
  %v437 = vmul.f32 %v358, %v432
  %v438 = vmul.f32 %v359, %v432
  %v439 = vmul.f32 %v360, %v432
  %v440 = vmul.f32 %v361, %v432
  %v441 = vmul.f32 %v362, %v432
  %s442 = scalar_lea.vmem %s3, 1
  %v443 = vld [vmem:[%s442] sm:$0x1]
  %v445 = vlaneseq
  %v446 = vshrl.u32 %v445, 7
  %v447 = vsub.s32 0, %v446
  %v448 = vrot.slane %v443, %v447
  %v450 = vmul.f32 %v363, %v448
  %v451 = vmul.f32 %v364, %v448
  %v452 = vmul.f32 %v365, %v448
  %v453 = vmul.f32 %v366, %v448
  %v454 = vmul.f32 %v367, %v448
  %v455 = vmul.f32 %v368, %v448
  %v456 = vmul.f32 %v369, %v448
  %v457 = vmul.f32 %v370, %v448
  %s458 = scalar_lea.vmem %s3, 2
  %v459 = vld [vmem:[%s458] sm:$0x1]
  %v461 = vlaneseq
  %v462 = vshrl.u32 %v461, 7
  %v463 = vsub.s32 0, %v462
  %v464 = vrot.slane %v459, %v463
  %v466 = vmul.f32 %v371, %v464
  %v467 = vmul.f32 %v372, %v464
  %v468 = vmul.f32 %v373, %v464
  %v469 = vmul.f32 %v374, %v464
  %v470 = vmul.f32 %v375, %v464
  %v471 = vmul.f32 %v376, %v464
  %v472 = vmul.f32 %v377, %v464
  %v473 = vmul.f32 %v378, %v464
  %s474 = scalar_lea.vmem %s3, 3
  %v475 = vld [vmem:[%s474] sm:$0x1]
  %v477 = vlaneseq
  %v478 = vshrl.u32 %v477, 7
  %v479 = vsub.s32 0, %v478
  %v480 = vrot.slane %v475, %v479
  %v482 = vmul.f32 %v379, %v480
  %v483 = vmul.f32 %v380, %v480
  %v484 = vmul.f32 %v381, %v480
  %v485 = vmul.f32 %v382, %v480
  %v486 = vmul.f32 %v383, %v480
  %v487 = vmul.f32 %v384, %v480
  %v488 = vmul.f32 %v385, %v480
  %v489 = vmul.f32 %v386, %v480
  %s490 = scalar_lea.vmem %s3, 4
  %v491 = vld [vmem:[%s490] sm:$0x1]
  %v493 = vlaneseq
  %v494 = vshrl.u32 %v493, 7
  %v495 = vsub.s32 0, %v494
  %v496 = vrot.slane %v491, %v495
  %v498 = vmul.f32 %v387, %v496
  %v499 = vmul.f32 %v388, %v496
  %v500 = vmul.f32 %v389, %v496
  %v501 = vmul.f32 %v390, %v496
  %v502 = vmul.f32 %v391, %v496
  %v503 = vmul.f32 %v392, %v496
  %v504 = vmul.f32 %v393, %v496
  %v505 = vmul.f32 %v394, %v496
  %s506 = scalar_lea.vmem %s3, 5
  %v507 = vld [vmem:[%s506] sm:$0x1]
  %v509 = vlaneseq
  %v510 = vshrl.u32 %v509, 7
  %v511 = vsub.s32 0, %v510
  %v512 = vrot.slane %v507, %v511
  %v514 = vmul.f32 %v395, %v512
  %v515 = vmul.f32 %v396, %v512
  %v516 = vmul.f32 %v397, %v512
  %v517 = vmul.f32 %v398, %v512
  %v518 = vmul.f32 %v399, %v512
  %v519 = vmul.f32 %v400, %v512
  %v520 = vmul.f32 %v401, %v512
  %v521 = vmul.f32 %v402, %v512
  %s522 = scalar_lea.vmem %s3, 6
  %v523 = vld [vmem:[%s522] sm:$0x1]
  %v525 = vlaneseq
  %v526 = vshrl.u32 %v525, 7
  %v527 = vsub.s32 0, %v526
  %v528 = vrot.slane %v523, %v527
  %v530 = vmul.f32 %v403, %v528
  %v531 = vmul.f32 %v404, %v528
  %v532 = vmul.f32 %v405, %v528
  %v533 = vmul.f32 %v406, %v528
  %v534 = vmul.f32 %v407, %v528
  %v535 = vmul.f32 %v408, %v528
  %v536 = vmul.f32 %v409, %v528
  %v537 = vmul.f32 %v410, %v528
  %s538 = scalar_lea.vmem %s3, 7
  %v539 = vld [vmem:[%s538] sm:$0x1]
  %v541 = vlaneseq
  %v542 = vshrl.u32 %v541, 7
  %v543 = vsub.s32 0, %v542
  %v544 = vrot.slane %v539, %v543
  %v546 = vmul.f32 %v411, %v544
  %v547 = vmul.f32 %v412, %v544
  %v548 = vmul.f32 %v413, %v544
  %v549 = vmul.f32 %v414, %v544
  %v550 = vmul.f32 %v415, %v544
  %v551 = vmul.f32 %v416, %v544
  %v552 = vmul.f32 %v417, %v544
  %v553 = vmul.f32 %v418, %v544
  %s554 = scalar_lea.vmem %s3, 8
  %v555 = vld [vmem:[%s554] sm:$0x1]
  %v557 = vlaneseq
  %v558 = vshrl.u32 %v557, 7
  %v559 = vsub.s32 0, %v558
  %v560 = vrot.slane %v555, %v559
  %v562 = vmul.f32 %v419, %v560
  %v563 = vmul.f32 %v420, %v560
  %v564 = vmul.f32 %v421, %v560
  %v565 = vmul.f32 %v422, %v560
  %v566 = vmul.f32 %v423, %v560
  %v567 = vmul.f32 %v424, %v560
  %v568 = vmul.f32 %v425, %v560
  %v569 = vmul.f32 %v426, %v560
  %v570 = vadd.f32 %v434, %v450
  %v571 = vadd.f32 %v435, %v451
  %v572 = vadd.f32 %v436, %v452
  %v573 = vadd.f32 %v437, %v453
  %v574 = vadd.f32 %v438, %v454
  %v575 = vadd.f32 %v439, %v455
  %v576 = vadd.f32 %v440, %v456
  %v577 = vadd.f32 %v441, %v457
  %v578 = vadd.f32 %v466, %v482
  %v579 = vadd.f32 %v467, %v483
  %v580 = vadd.f32 %v468, %v484
  %v581 = vadd.f32 %v469, %v485
  %v582 = vadd.f32 %v470, %v486
  %v583 = vadd.f32 %v471, %v487
  %v584 = vadd.f32 %v472, %v488
  %v585 = vadd.f32 %v473, %v489
  %v586 = vadd.f32 %v498, %v514
  %v587 = vadd.f32 %v499, %v515
  %v588 = vadd.f32 %v500, %v516
  %v589 = vadd.f32 %v501, %v517
  %v590 = vadd.f32 %v502, %v518
  %v591 = vadd.f32 %v503, %v519
  %v592 = vadd.f32 %v504, %v520
  %v593 = vadd.f32 %v505, %v521
  %v594 = vadd.f32 %v530, %v546
  %v595 = vadd.f32 %v531, %v547
  %v596 = vadd.f32 %v532, %v548
  %v597 = vadd.f32 %v533, %v549
  %v598 = vadd.f32 %v534, %v550
  %v599 = vadd.f32 %v535, %v551
  %v600 = vadd.f32 %v536, %v552
  %v601 = vadd.f32 %v537, %v553
  %v602 = vadd.f32 %v570, %v578
  %v603 = vadd.f32 %v571, %v579
  %v604 = vadd.f32 %v572, %v580
  %v605 = vadd.f32 %v573, %v581
  %v606 = vadd.f32 %v574, %v582
  %v607 = vadd.f32 %v575, %v583
  %v608 = vadd.f32 %v576, %v584
  %v609 = vadd.f32 %v577, %v585
  %v610 = vadd.f32 %v586, %v594
  %v611 = vadd.f32 %v587, %v595
  %v612 = vadd.f32 %v588, %v596
  %v613 = vadd.f32 %v589, %v597
  %v614 = vadd.f32 %v590, %v598
  %v615 = vadd.f32 %v591, %v599
  %v616 = vadd.f32 %v592, %v600
  %v617 = vadd.f32 %v593, %v601
  %v618 = vadd.f32 %v602, %v610
  %v619 = vadd.f32 %v603, %v611
  %v620 = vadd.f32 %v604, %v612
  %v621 = vadd.f32 %v605, %v613
  %v622 = vadd.f32 %v606, %v614
  %v623 = vadd.f32 %v607, %v615
  %v624 = vadd.f32 %v608, %v616
  %v625 = vadd.f32 %v609, %v617
  %v626 = vadd.f32 %v618, %v562
  %v627 = vadd.f32 %v619, %v563
  %v628 = vadd.f32 %v620, %v564
  %v629 = vadd.f32 %v621, %v565
  %v630 = vadd.f32 %v622, %v566
  %v631 = vadd.f32 %v623, %v567
  %v632 = vadd.f32 %v624, %v568
  %v633 = vadd.f32 %v625, %v569
  %v634 = vld [vmem:[%s4] sm:$0x1]
  %v636 = vlaneseq
  %v637 = vshrl.u32 %v636, 7
  %v638 = vsub.s32 0, %v637
  %v639 = vrot.slane %v634, %v638
  %v641 = vadd.f32 %v626, %v639
  %v642 = vadd.f32 %v627, %v639
  %v643 = vadd.f32 %v628, %v639
  %v644 = vadd.f32 %v629, %v639
  %v645 = vadd.f32 %v630, %v639
  %v646 = vadd.f32 %v631, %v639
  %v647 = vadd.f32 %v632, %v639
  %v648 = vadd.f32 %v633, %v639
  %v649 = vmax.f32 %v641, 0.0
  %v650 = vmax.f32 %v642, 0.0
  %v651 = vmax.f32 %v643, 0.0
  %v652 = vmax.f32 %v644, 0.0
  %v653 = vmax.f32 %v645, 0.0
  %v654 = vmax.f32 %v646, 0.0
  %v655 = vmax.f32 %v647, 0.0
  %v656 = vmax.f32 %v648, 0.0
  %v657 = vmin.f32 %v649, 6.0
  %v658 = vmin.f32 %v650, 6.0
  %v659 = vmin.f32 %v651, 6.0
  %v660 = vmin.f32 %v652, 6.0
  %v661 = vmin.f32 %v653, 6.0
  %v662 = vmin.f32 %v654, 6.0
  %v663 = vmin.f32 %v655, 6.0
  %v664 = vmin.f32 %v656, 6.0
  %v665 = vpack.c.bf16 %v657, %v657
  %v666 = vpack.c.bf16 %v658, %v658
  %v667 = vpack.c.bf16 %v659, %v659
  %v668 = vpack.c.bf16 %v660, %v660
  %v669 = vpack.c.bf16 %v661, %v661
  %v670 = vpack.c.bf16 %v662, %v662
  %v671 = vpack.c.bf16 %v663, %v663
  %v672 = vpack.c.bf16 %v664, %v664
  %vm673 = vcmask 386048
  %674 = vst.msk [vmem:[#allocation4] sm:$0x3] %vm673, %v665
  %v676 = vrot.slane %v666, 6
  %vm678 = vcmask 388098
  %679 = vst.msk [vmem:[#allocation4] sm:$0xc] %vm678, %v676
  %v681 = vrot.slane %v667, 4
  %vm683 = vcmask 390148
  %684 = vst.msk [vmem:[#allocation4] sm:$0x30] %vm683, %v681
  %v686 = vrot.slane %v668, 2
  %vm688 = vcmask 392198
  %689 = vst.msk [vmem:[#allocation4] sm:$0xc0] %vm688, %v686
  %690 = vst.msk [vmem:[#allocation4 + $0x8] sm:$0x3] %vm673, %v669
  %v692 = vrot.slane %v670, 6
  %694 = vst.msk [vmem:[#allocation4 + $0x8] sm:$0xc] %vm678, %v692
  %v696 = vrot.slane %v671, 4
  %698 = vst.msk [vmem:[#allocation4 + $0x8] sm:$0x30] %vm683, %v696
  %v700 = vrot.slane %v672, 2
  %702 = vst.msk [vmem:[#allocation4 + $0x8] sm:$0xc0] %vm688, %v700
  %v703 = vld [vmem:[#allocation4] sm:$0xff]
  %v704 = vld [vmem:[#allocation4 + $0x8] sm:$0xff]
  %v705 = vld [vmem:[%s5] sm:$0xf]
  %v706 = vld [vmem:[%s5 + $0x4] sm:$0xf]
  %v707 = vld [vmem:[%s5 + $0x8] sm:$0xf]
  %v708 = vld [vmem:[%s5 + $0xc] sm:$0xf]
  %v709 = vld [vmem:[%s5 + $0x10] sm:$0xf]
  %v710 = vld [vmem:[%s5 + $0x14] sm:$0xf]
  %v711 = vld [vmem:[%s6] sm:$0x1]
  %v713 = vlaneseq
  %v714 = vshrl.u32 %v713, 7
  %v715 = vsub.s32 0, %v714
  %v716 = vrot.slane %v711, %v715
  %v724 = vunpack.c.l.b16 %v705
  %v725 = vunpack.c.l.b16 %v706
  %v726 = vunpack.c.l.b16 %v707
  %v727 = vunpack.c.l.b16 %v708
  %v728 = vunpack.c.l.b16 %v709
  %v729 = vunpack.c.l.b16 %v710
  %v730 = vpack.c.b16 %v725, %v724
  %v731 = vpack.c.b16 %v727, %v726
  %v732 = vpack.c.b16 %v729, %v728
  %v737 = vsel %vm249, %v703, 0
  %v740 = vsel %vm249, %v704, 0
  %742 = vmatprep.subr.bf16.mxu0 0
  %743 = vmatpush1.bf16.msra.mxu0 %v730
  %744 = vmatprep.subr.bf16.mxu0 0
  %745 = vmatpush1.bf16.msra.mxu0 %v731
  %746 = vmatprep.subr.bf16.mxu0 0
  %747 = vmatpush1.bf16.msra.mxu0 %v732
  %748 = vmatprep.subr.bf16.mxu0 0
  %749 = vmatpush1.bf16.msra.mxu0 0
  %750 = vmatprep.subr.bf16.mxu0 0
  %751 = vmatpush1.bf16.msra.mxu0 0
  %752 = vmatprep.subr.bf16.mxu0 0
  %753 = vmatpush1.bf16.msra.mxu0 0
  %754 = vmatprep.subr.bf16.mxu0 0
  %755 = vmatpush1.bf16.msra.mxu0 0
  %756 = vmatprep.subr.bf16.mxu0 0
  %757 = vmatpush1.bf16.msra.mxu0 0
  %758 = vmatprep.subr.bf16.mxu0 0
  %759 = vmatpush1.bf16.msra.mxu0 0
  %760 = vmatprep.subr.bf16.mxu0 0
  %761 = vmatpush1.bf16.msra.mxu0 0
  %762 = vmatprep.subr.bf16.mxu0 0
  %763 = vmatpush1.bf16.msra.mxu0 0
  %764 = vmatprep.subr.bf16.mxu0 0
  %765 = vmatpush1.bf16.msra.mxu0 0
  %766 = vmatprep.subr.bf16.mxu0 0
  %767 = vmatpush1.bf16.msra.mxu0 0
  %768 = vmatprep.subr.bf16.mxu0 0
  %769 = vmatpush1.bf16.msra.mxu0 0
  %770 = vmatprep.subr.bf16.mxu0 0
  %771 = vmatpush1.bf16.msra.mxu0 0
  %772 = vmatprep.subr.bf16.mxu0 0
  %773 = vmatpush1.bf16.msra.mxu0 0
  %774 = vmatprep.mubr.bf16.mxu0 0
  %775 = vmatmul.mubr.bf16.gmra.mrb[0].mxu0 %v737
  %v776 = vpop.f32.mrb[0].mxu0
  %v777 = vadd.f32 %v716, %v776
  %v778 = vpop.f32.mrb[0].mxu0
  %v779 = vpop.f32.mrb[0].mxu0
  %v780 = vadd.f32 %v716, %v779
  %v781 = vpop.f32.mrb[0].mxu0
  %782 = vmatprep.mubr.bf16.mxu0 0
  %783 = vmatmul.mubr.bf16.gmra.mrb[0].mxu0 %v740
  %v784 = vpop.f32.mrb[0].mxu0
  %v785 = vadd.f32 %v716, %v784
  %v786 = vpop.f32.mrb[0].mxu0
  %v787 = vpop.f32.mrb[0].mxu0
  %v788 = vadd.f32 %v716, %v787
  %v789 = vpop.f32.mrb[0].mxu0
  %790 = vdwg.mxu0
  %v791 = vpack.c.bf16 %v780, %v777
  %v792 = vpack.c.bf16 %v788, %v785
  %v795 = vunpack.c.l.b16 %v791
  %v796 = vunpack.c.h.b16 %v791
  %v797 = vunpack.c.l.b16 %v792
  %v798 = vunpack.c.h.b16 %v792
  %v799 = vpack.c.b16 %v795, %v795
  %v800 = vpack.c.b16 %v796, %v796
  %v801 = vpack.c.b16 %v797, %v797
  %v802 = vpack.c.b16 %v798, %v798
  %vm807 = vcmask 125952
  %808 = vst.msk [vmem:[%s7] sm:$0xf] %vm807, %v799
  %809 = vst.msk [vmem:[%s7 + $0x4] sm:$0xf] %vm807, %v800
  %810 = vst.msk [vmem:[%s7 + $0x8] sm:$0xf] %vm807, %v801
  %811 = vst.msk [vmem:[%s7 + $0xc] sm:$0xf] %vm807, %v802
  // Predicated region
  $region30: #{tpu_custom_call.1} parent=0 // pred_check
    _
  $region31: #{tpu_custom_call.1} parent=0 // pred_check_branch
    %813 = sbr.rel (0) target = $region33
  $region32: #{tpu_custom_call.1} parent=0 // pred_region
    _
  $region33: #{tpu_custom_call.1} parent=0 // pred_fallthru
    _
  // Predicated region
  $region34: #{tpu_custom_call.1} parent=0 // pred_check
    _
  $region35: #{tpu_custom_call.1} parent=0 // pred_check_branch
    %815 = sbr.rel (0) target = $region37
  $region36: #{tpu_custom_call.1} parent=0 // pred_region
    _
  $region37: #{tpu_custom_call.1} parent=0 // pred_fallthru
    _

</llo_original>
